<compile_context>
chip_gen: v6e
topology: v6e:2x2x1
jax: 0.10.0
libtpu: 0.0.40
codegen_flags: <defaults>
</compile_context>

<pallas_src>
from functools import partial

import numpy as np
import jax
import jax.numpy as jnp
from jax.experimental import pallas as pl
from jax.experimental.pallas import tpu as pltpu


# ----------------------- static tap tables (host side) -----------------------

def _tap_shifts_and_masks(kh, kw, H, W):
    """Per-tap flat roll shift and validity mask implementing 'same' zero-pad.

    For tap (i, j) with offsets dr = i - kh//2, dc = j - kw//2:
      out[h, w] += w[i, j] * x[h + dr, w + dc]   (0 when out of bounds)
    On the flattened (H*W,) axis this is roll(x, -(dr*W + dc)) masked where
    (h + dr, w + dc) falls outside the image.
    """
    ph, pw = kh // 2, kw // 2
    hh = np.arange(H)[:, None]
    ww = np.arange(W)[None, :]
    shifts, masks = [], []
    for i in range(kh):
        for j in range(kw):
            dr, dc = i - ph, j - pw
            shifts.append((-(dr * W + dc)) % (H * W))
            valid = (hh + dr >= 0) & (hh + dr < H) & (ww + dc >= 0) & (ww + dc < W)
            masks.append(valid.reshape(-1))
    return tuple(shifts), jnp.asarray(np.stack(masks).astype(np.float32))


# ------------------------------ Pallas kernel --------------------------------

def _inception_dw_kernel(x_ref, w_hw_ref, b_hw_ref, w_w_ref, b_w_ref,
                         w_h_ref, b_h_ref, m_hw_ref, m_w_ref, m_h_ref,
                         o_ref, *, s_id, gc, shifts_hw, shifts_w, shifts_h):
    # x_ref / o_ref : (1, C, H*W) VMEM blocks (one batch element, lane-dense).
    # w_*_ref       : (gc, n_taps) VMEM   per-channel depthwise taps
    # b_*_ref       : (gc, 1)      VMEM   per-channel bias
    # m_*_ref       : (n_taps, H*W) VMEM  per-tap 0/1 validity mask ('same' pad)
    if s_id > 0:
        # Identity channels: straight copy into their output range.
        o_ref[0, 0:s_id, :] = x_ref[0, 0:s_id, :]

    def dw_branch(c0, w_ref, b_ref, m_ref, shifts):
        xb = x_ref[0, c0:c0 + gc, :].astype(jnp.float32)          # (gc, HW)
        acc = jnp.zeros(xb.shape, jnp.float32)
        for t, s in enumerate(shifts):                            # static unroll
            xs = pltpu.roll(xb, shift=s, axis=1) if s else xb     # flat shift (XLU)
            # (gc,1) per-channel tap weight  *  (1,HW) per-tap validity mask
            acc = acc + xs * (w_ref[:, t:t + 1] * m_ref[t:t + 1, :])
        o_ref[0, c0:c0 + gc, :] = (acc + b_ref[:, :]).astype(o_ref.dtype)

    dw_branch(s_id,          w_hw_ref, b_hw_ref, m_hw_ref, shifts_hw)   # 3x3
    dw_branch(s_id + gc,     w_w_ref,  b_w_ref,  m_w_ref,  shifts_w)    # 1x11
    dw_branch(s_id + 2 * gc, w_h_ref,  b_h_ref,  m_h_ref,  shifts_h)    # 11x1


# --------------------------- module-level wrapper ----------------------------

def init_inception_dwconv2d(key, in_channels, square_kernel_size=3,
                            band_kernel_size=11, branch_ratio=0.125):
    gc = int(in_channels * branch_ratio)
    ks = jax.random.split(key, 6)
    scale = 0.1
    params = {
        "w_hw": scale * jax.random.normal(ks[0], (gc, square_kernel_size, square_kernel_size), jnp.float32),
        "b_hw": scale * jax.random.normal(ks[1], (gc,), jnp.float32),
        "w_w":  scale * jax.random.normal(ks[2], (gc, 1, band_kernel_size), jnp.float32),
        "b_w":  scale * jax.random.normal(ks[3], (gc,), jnp.float32),
        "w_h":  scale * jax.random.normal(ks[4], (gc, band_kernel_size, 1), jnp.float32),
        "b_h":  scale * jax.random.normal(ks[5], (gc,), jnp.float32),
    }
    split_indexes = (in_channels - 3 * gc, gc, gc, gc)
    return params, split_indexes


def inception_dwconv2d(x, params, split_indexes,
                       square_kernel_size=3, band_kernel_size=11):
    """Fused Inception depthwise conv, NCHW in / NCHW out."""
    N, C, H, W = x.shape
    HW = H * W
    s_id, gc, _, _ = split_indexes
    sk, bk = square_kernel_size, band_kernel_size

    shifts_hw, masks_hw = _tap_shifts_and_masks(sk, sk, H, W)
    shifts_w, masks_w = _tap_shifts_and_masks(1, bk, H, W)
    shifts_h, masks_h = _tap_shifts_and_masks(bk, 1, H, W)

    x_flat = x.reshape(N, C, HW)                       # free view of NCHW
    w_hw = params["w_hw"].reshape(gc, sk * sk)
    w_w = params["w_w"].reshape(gc, bk)
    w_h = params["w_h"].reshape(gc, bk)
    b_hw = params["b_hw"].reshape(gc, 1)
    b_w = params["b_w"].reshape(gc, 1)
    b_h = params["b_h"].reshape(gc, 1)

    kernel = partial(_inception_dw_kernel, s_id=s_id, gc=gc,
                     shifts_hw=shifts_hw, shifts_w=shifts_w, shifts_h=shifts_h)

    taps_total = sk * sk + 2 * bk
    cost = pl.CostEstimate(
        flops=3 * N * gc * HW * taps_total,
        transcendentals=0,
        bytes_accessed=4 * (2 * N * C * HW + gc * (taps_total + 3) + taps_total * HW),
    )

    x_map = lambda n: (n, 0, 0)
    p_map = lambda n: (0, 0)

    # NOTE: one (C, H*W) slab per grid step fits easily in VMEM at these sizes
    # (demo: 32 KiB per buffer).  For much larger C*H*W, block the channel axis
    # per branch and/or raise vmem_limit_bytes (v7x has 64 MiB VMEM).
    out = pl.pallas_call(
        kernel,
        out_shape=jax.ShapeDtypeStruct((N, C, HW), x.dtype),
        grid=(N,),
        in_specs=[
            pl.BlockSpec((1, C, HW), x_map),       # activations (lane-dense)
            pl.BlockSpec((gc, sk * sk), p_map),    # w_hw
            pl.BlockSpec((gc, 1), p_map),          # b_hw
            pl.BlockSpec((gc, bk), p_map),         # w_w
            pl.BlockSpec((gc, 1), p_map),          # b_w
            pl.BlockSpec((gc, bk), p_map),         # w_h
            pl.BlockSpec((gc, 1), p_map),          # b_h
            pl.BlockSpec((sk * sk, HW), p_map),    # masks 3x3
            pl.BlockSpec((bk, HW), p_map),         # masks 1x11
            pl.BlockSpec((bk, HW), p_map),         # masks 11x1
        ],
        out_specs=pl.BlockSpec((1, C, HW), x_map),
        compiler_params=pltpu.CompilerParams(
            dimension_semantics=("parallel",)),
        cost_estimate=cost,
    )(x_flat, w_hw, b_hw, w_w, b_w, w_h, b_h, masks_hw, masks_w, masks_h)

    return out.reshape(N, C, H, W)


# ------------------------------ reference (XLA) -------------------------------

def _ref_dwconv(x, w, b, kh, kw):
    C = x.shape[1]
    out = jax.lax.conv_general_dilated(
        x, w.reshape(C, 1, kh, kw),
        window_strides=(1, 1),
        padding=((kh // 2, kh // 2), (kw // 2, kw // 2)),
        dimension_numbers=("NCHW", "OIHW", "NCHW"),
        feature_group_count=C)
    return out + b.reshape(1, C, 1, 1)


def _ref_forward(x, params, split_indexes, sk=3, bk=11):
    s_id, gc, _, _ = split_indexes
    x_id = x[:, :s_id]
    x_hw = x[:, s_id:s_id + gc]
    x_w = x[:, s_id + gc:s_id + 2 * gc]
    x_h = x[:, s_id + 2 * gc:s_id + 3 * gc]
    return jnp.concatenate([
        x_id,
        _ref_dwconv(x_hw, params["w_hw"], params["b_hw"], sk, sk),
        _ref_dwconv(x_w, params["w_w"], params["b_w"], 1, bk),
        _ref_dwconv(x_h, params["w_h"], params["b_h"], bk, 1),
    ], axis=1)


# ----------------------------------- main -------------------------------------

if __name__ == "__main__":
    key = jax.random.PRNGKey(0)
    k_x, k_p = jax.random.split(key)

    N, C, H, W = 2, 32, 16, 16   # gc = 32 * 0.125 = 4 -> split (20, 4, 4, 4)
    x = jax.random.normal(k_x, (N, C, H, W), jnp.float32)

    params, split_indexes = init_inception_dwconv2d(k_p, C)

    out = inception_dwconv2d(x, params, split_indexes)
    out = jax.block_until_ready(out)

    ref = _ref_forward(x, params, split_indexes)
    assert out.shape == (N, C, H, W), out.shape
    assert jnp.allclose(out, ref, atol=1e-4, rtol=1e-4), "mismatch vs reference"

    print("KERNEL_OK")
</pallas_src>

<mosaic_0001>
module attributes {stable_mosaic.version = 11 : i64} {
  func.func @_inception_dw_kernel(%arg0: i32, %arg1: memref<1x32x256xf32, #tpu.memory_space<vmem>>, %arg2: memref<4x9xf32, #tpu.memory_space<vmem>>, %arg3: memref<4x1xf32, #tpu.memory_space<vmem>>, %arg4: memref<4x11xf32, #tpu.memory_space<vmem>>, %arg5: memref<4x1xf32, #tpu.memory_space<vmem>>, %arg6: memref<4x11xf32, #tpu.memory_space<vmem>>, %arg7: memref<4x1xf32, #tpu.memory_space<vmem>>, %arg8: memref<9x256xf32, #tpu.memory_space<vmem>>, %arg9: memref<11x256xf32, #tpu.memory_space<vmem>>, %arg10: memref<11x256xf32, #tpu.memory_space<vmem>>, %arg11: memref<1x32x256xf32, #tpu.memory_space<vmem>>) attributes {dimension_semantics = [#tpu.dimension_semantics<parallel>], iteration_bounds = array<i64: 2>, scalar_prefetch = 0 : i64, scratch_operands = 0 : i64, tpu.core_type = #tpu.core_type<tc>, window_params = [{transform_indices = @transform_0, window_bounds = array<i64: 1, 32, 256>}, {pipeline_mode = #tpu.pipeline_mode<synchronous>, transform_indices = @transform_1, window_bounds = array<i64: 4, 9>}, {pipeline_mode = #tpu.pipeline_mode<synchronous>, transform_indices = @transform_2, window_bounds = array<i64: 4, 1>}, {pipeline_mode = #tpu.pipeline_mode<synchronous>, transform_indices = @transform_3, window_bounds = array<i64: 4, 11>}, {pipeline_mode = #tpu.pipeline_mode<synchronous>, transform_indices = @transform_4, window_bounds = array<i64: 4, 1>}, {pipeline_mode = #tpu.pipeline_mode<synchronous>, transform_indices = @transform_5, window_bounds = array<i64: 4, 11>}, {pipeline_mode = #tpu.pipeline_mode<synchronous>, transform_indices = @transform_6, window_bounds = array<i64: 4, 1>}, {pipeline_mode = #tpu.pipeline_mode<synchronous>, transform_indices = @transform_7, window_bounds = array<i64: 9, 256>}, {pipeline_mode = #tpu.pipeline_mode<synchronous>, transform_indices = @transform_8, window_bounds = array<i64: 11, 256>}, {pipeline_mode = #tpu.pipeline_mode<synchronous>, transform_indices = @transform_9, window_bounds = array<i64: 11, 256>}, {transform_indices = @transform_10, window_bounds = array<i64: 1, 32, 256>}]} {
    %c0 = arith.constant 0 : index
    %c0_0 = arith.constant 0 : index
    %c0_1 = arith.constant 0 : index
    %0 = vector.load %arg1[%c0, %c0_0, %c0_1] : memref<1x32x256xf32, #tpu.memory_space<vmem>>, vector<1x20x256xf32>
    %1 = vector.shape_cast %0 : vector<1x20x256xf32> to vector<20x256xf32>
    %c0_2 = arith.constant 0 : index
    %c0_3 = arith.constant 0 : index
    %c0_4 = arith.constant 0 : index
    %2 = vector.load %arg11[%c0_2, %c0_3, %c0_4] : memref<1x32x256xf32, #tpu.memory_space<vmem>>, vector<1x20x256xf32>
    %3 = vector.shape_cast %2 : vector<1x20x256xf32> to vector<20x256xf32>
    %4 = vector.shape_cast %1 : vector<20x256xf32> to vector<1x20x256xf32>
    tpu.vector_store %arg11[%c0_2, %c0_3, %c0_4], %4 {strides = array<i32>} : memref<1x32x256xf32, #tpu.memory_space<vmem>>, vector<1x20x256xf32>,
    %c0_5 = arith.constant 0 : index
    %c20 = arith.constant 20 : index
    %c0_6 = arith.constant 0 : index
    %5 = vector.load %arg1[%c0_5, %c20, %c0_6] : memref<1x32x256xf32, #tpu.memory_space<vmem>>, vector<1x4x256xf32>
    %6 = vector.shape_cast %5 : vector<1x4x256xf32> to vector<4x256xf32>
    %cst = arith.constant 0.000000e+00 : f32
    %7 = vector.broadcast %cst : f32 to vector<4x256xf32>
    %c17_i32 = arith.constant 17 : i32
    %8 = tpu.dynamic_rotate %6 by %c17_i32 dim 1 : vector<4x256xf32>, i32 -> vector<4x256xf32>
    %c0_7 = arith.constant 0 : index
    %c0_8 = arith.constant 0 : index
    %9 = vector.load %arg2[%c0_7, %c0_8] : memref<4x9xf32, #tpu.memory_space<vmem>>, vector<4x1xf32>
    %c0_9 = arith.constant 0 : index
    %c0_10 = arith.constant 0 : index
    %10 = vector.load %arg8[%c0_9, %c0_10] : memref<9x256xf32, #tpu.memory_space<vmem>>, vector<1x256xf32>
    %11 = vector.broadcast %9 : vector<4x1xf32> to vector<4x256xf32>
    %12 = vector.broadcast %10 : vector<1x256xf32> to vector<4x256xf32>
    %13 = arith.mulf %11, %12 : vector<4x256xf32>
    %14 = arith.mulf %8, %13 : vector<4x256xf32>
    %15 = arith.addf %7, %14 : vector<4x256xf32>
    %c16_i32 = arith.constant 16 : i32
    %16 = tpu.dynamic_rotate %6 by %c16_i32 dim 1 : vector<4x256xf32>, i32 -> vector<4x256xf32>
    %c0_11 = arith.constant 0 : index
    %c1 = arith.constant 1 : index
    %17 = vector.load %arg2[%c0_11, %c1] : memref<4x9xf32, #tpu.memory_space<vmem>>, vector<4x1xf32>
    %c1_12 = arith.constant 1 : index
    %c0_13 = arith.constant 0 : index
    %18 = vector.load %arg8[%c1_12, %c0_13] : memref<9x256xf32, #tpu.memory_space<vmem>>, vector<1x256xf32>
    %19 = vector.broadcast %17 : vector<4x1xf32> to vector<4x256xf32>
    %20 = vector.broadcast %18 : vector<1x256xf32> to vector<4x256xf32>
    %21 = arith.mulf %19, %20 : vector<4x256xf32>
    %22 = arith.mulf %16, %21 : vector<4x256xf32>
    %23 = arith.addf %15, %22 : vector<4x256xf32>
    %c15_i32 = arith.constant 15 : i32
    %24 = tpu.dynamic_rotate %6 by %c15_i32 dim 1 : vector<4x256xf32>, i32 -> vector<4x256xf32>
    %c0_14 = arith.constant 0 : index
    %c2 = arith.constant 2 : index
    %25 = vector.load %arg2[%c0_14, %c2] : memref<4x9xf32, #tpu.memory_space<vmem>>, vector<4x1xf32>
    %c2_15 = arith.constant 2 : index
    %c0_16 = arith.constant 0 : index
    %26 = vector.load %arg8[%c2_15, %c0_16] : memref<9x256xf32, #tpu.memory_space<vmem>>, vector<1x256xf32>
    %27 = vector.broadcast %25 : vector<4x1xf32> to vector<4x256xf32>
    %28 = vector.broadcast %26 : vector<1x256xf32> to vector<4x256xf32>
    %29 = arith.mulf %27, %28 : vector<4x256xf32>
    %30 = arith.mulf %24, %29 : vector<4x256xf32>
    %31 = arith.addf %23, %30 : vector<4x256xf32>
    %c1_i32 = arith.constant 1 : i32
    %32 = tpu.dynamic_rotate %6 by %c1_i32 dim 1 : vector<4x256xf32>, i32 -> vector<4x256xf32>
    %c0_17 = arith.constant 0 : index
    %c3 = arith.constant 3 : index
    %33 = vector.load %arg2[%c0_17, %c3] : memref<4x9xf32, #tpu.memory_space<vmem>>, vector<4x1xf32>
    %c3_18 = arith.constant 3 : index
    %c0_19 = arith.constant 0 : index
    %34 = vector.load %arg8[%c3_18, %c0_19] : memref<9x256xf32, #tpu.memory_space<vmem>>, vector<1x256xf32>
    %35 = vector.broadcast %33 : vector<4x1xf32> to vector<4x256xf32>
    %36 = vector.broadcast %34 : vector<1x256xf32> to vector<4x256xf32>
    %37 = arith.mulf %35, %36 : vector<4x256xf32>
    %38 = arith.mulf %32, %37 : vector<4x256xf32>
    %39 = arith.addf %31, %38 : vector<4x256xf32>
    %c0_20 = arith.constant 0 : index
    %c4 = arith.constant 4 : index
    %40 = vector.load %arg2[%c0_20, %c4] : memref<4x9xf32, #tpu.memory_space<vmem>>, vector<4x1xf32>
    %c4_21 = arith.constant 4 : index
    %c0_22 = arith.constant 0 : index
    %41 = vector.load %arg8[%c4_21, %c0_22] : memref<9x256xf32, #tpu.memory_space<vmem>>, vector<1x256xf32>
    %42 = vector.broadcast %40 : vector<4x1xf32> to vector<4x256xf32>
    %43 = vector.broadcast %41 : vector<1x256xf32> to vector<4x256xf32>
    %44 = arith.mulf %42, %43 : vector<4x256xf32>
    %45 = arith.mulf %6, %44 : vector<4x256xf32>
    %46 = arith.addf %39, %45 : vector<4x256xf32>
    %c255_i32 = arith.constant 255 : i32
    %47 = tpu.dynamic_rotate %6 by %c255_i32 dim 1 : vector<4x256xf32>, i32 -> vector<4x256xf32>
    %c0_23 = arith.constant 0 : index
    %c5 = arith.constant 5 : index
    %48 = vector.load %arg2[%c0_23, %c5] : memref<4x9xf32, #tpu.memory_space<vmem>>, vector<4x1xf32>
    %c5_24 = arith.constant 5 : index
    %c0_25 = arith.constant 0 : index
    %49 = vector.load %arg8[%c5_24, %c0_25] : memref<9x256xf32, #tpu.memory_space<vmem>>, vector<1x256xf32>
    %50 = vector.broadcast %48 : vector<4x1xf32> to vector<4x256xf32>
    %51 = vector.broadcast %49 : vector<1x256xf32> to vector<4x256xf32>
    %52 = arith.mulf %50, %51 : vector<4x256xf32>
    %53 = arith.mulf %47, %52 : vector<4x256xf32>
    %54 = arith.addf %46, %53 : vector<4x256xf32>
    %c241_i32 = arith.constant 241 : i32
    %55 = tpu.dynamic_rotate %6 by %c241_i32 dim 1 : vector<4x256xf32>, i32 -> vector<4x256xf32>
    %c0_26 = arith.constant 0 : index
    %c6 = arith.constant 6 : index
    %56 = vector.load %arg2[%c0_26, %c6] : memref<4x9xf32, #tpu.memory_space<vmem>>, vector<4x1xf32>
    %c6_27 = arith.constant 6 : index
    %c0_28 = arith.constant 0 : index
    %57 = vector.load %arg8[%c6_27, %c0_28] : memref<9x256xf32, #tpu.memory_space<vmem>>, vector<1x256xf32>
    %58 = vector.broadcast %56 : vector<4x1xf32> to vector<4x256xf32>
    %59 = vector.broadcast %57 : vector<1x256xf32> to vector<4x256xf32>
    %60 = arith.mulf %58, %59 : vector<4x256xf32>
    %61 = arith.mulf %55, %60 : vector<4x256xf32>
    %62 = arith.addf %54, %61 : vector<4x256xf32>
    %c240_i32 = arith.constant 240 : i32
    %63 = tpu.dynamic_rotate %6 by %c240_i32 dim 1 : vector<4x256xf32>, i32 -> vector<4x256xf32>
    %c0_29 = arith.constant 0 : index
    %c7 = arith.constant 7 : index
    %64 = vector.load %arg2[%c0_29, %c7] : memref<4x9xf32, #tpu.memory_space<vmem>>, vector<4x1xf32>
    %c7_30 = arith.constant 7 : index
    %c0_31 = arith.constant 0 : index
    %65 = vector.load %arg8[%c7_30, %c0_31] : memref<9x256xf32, #tpu.memory_space<vmem>>, vector<1x256xf32>
    %66 = vector.broadcast %64 : vector<4x1xf32> to vector<4x256xf32>
    %67 = vector.broadcast %65 : vector<1x256xf32> to vector<4x256xf32>
    %68 = arith.mulf %66, %67 : vector<4x256xf32>
    %69 = arith.mulf %63, %68 : vector<4x256xf32>
    %70 = arith.addf %62, %69 : vector<4x256xf32>
    %c239_i32 = arith.constant 239 : i32
    %71 = tpu.dynamic_rotate %6 by %c239_i32 dim 1 : vector<4x256xf32>, i32 -> vector<4x256xf32>
    %c0_32 = arith.constant 0 : index
    %c8 = arith.constant 8 : index
    %72 = vector.load %arg2[%c0_32, %c8] : memref<4x9xf32, #tpu.memory_space<vmem>>, vector<4x1xf32>
    %c8_33 = arith.constant 8 : index
    %c0_34 = arith.constant 0 : index
    %73 = vector.load %arg8[%c8_33, %c0_34] : memref<9x256xf32, #tpu.memory_space<vmem>>, vector<1x256xf32>
    %74 = vector.broadcast %72 : vector<4x1xf32> to vector<4x256xf32>
    %75 = vector.broadcast %73 : vector<1x256xf32> to vector<4x256xf32>
    %76 = arith.mulf %74, %75 : vector<4x256xf32>
    %77 = arith.mulf %71, %76 : vector<4x256xf32>
    %78 = arith.addf %70, %77 : vector<4x256xf32>
    %c0_35 = arith.constant 0 : index
    %c0_36 = arith.constant 0 : index
    %79 = vector.load %arg3[%c0_35, %c0_36] : memref<4x1xf32, #tpu.memory_space<vmem>>, vector<4x1xf32>
    %80 = vector.broadcast %79 : vector<4x1xf32> to vector<4x256xf32>
    %81 = arith.addf %78, %80 : vector<4x256xf32>
    %c0_37 = arith.constant 0 : index
    %c20_38 = arith.constant 20 : index
    %c0_39 = arith.constant 0 : index
    %82 = vector.load %arg11[%c0_37, %c20_38, %c0_39] : memref<1x32x256xf32, #tpu.memory_space<vmem>>, vector<1x4x256xf32>
    %83 = vector.shape_cast %82 : vector<1x4x256xf32> to vector<4x256xf32>
    %84 = vector.shape_cast %81 : vector<4x256xf32> to vector<1x4x256xf32>
    tpu.vector_store %arg11[%c0_37, %c20_38, %c0_39], %84 {strides = array<i32>} : memref<1x32x256xf32, #tpu.memory_space<vmem>>, vector<1x4x256xf32>,
    %c0_40 = arith.constant 0 : index
    %c24 = arith.constant 24 : index
    %c0_41 = arith.constant 0 : index
    %85 = vector.load %arg1[%c0_40, %c24, %c0_41] : memref<1x32x256xf32, #tpu.memory_space<vmem>>, vector<1x4x256xf32>
    %86 = vector.shape_cast %85 : vector<1x4x256xf32> to vector<4x256xf32>
    %cst_42 = arith.constant 0.000000e+00 : f32
    %87 = vector.broadcast %cst_42 : f32 to vector<4x256xf32>
    %c5_i32 = arith.constant 5 : i32
    %88 = tpu.dynamic_rotate %86 by %c5_i32 dim 1 : vector<4x256xf32>, i32 -> vector<4x256xf32>
    %c0_43 = arith.constant 0 : index
    %c0_44 = arith.constant 0 : index
    %89 = vector.load %arg4[%c0_43, %c0_44] : memref<4x11xf32, #tpu.memory_space<vmem>>, vector<4x1xf32>
    %c0_45 = arith.constant 0 : index
    %c0_46 = arith.constant 0 : index
    %90 = vector.load %arg9[%c0_45, %c0_46] : memref<11x256xf32, #tpu.memory_space<vmem>>, vector<1x256xf32>
    %91 = vector.broadcast %89 : vector<4x1xf32> to vector<4x256xf32>
    %92 = vector.broadcast %90 : vector<1x256xf32> to vector<4x256xf32>
    %93 = arith.mulf %91, %92 : vector<4x256xf32>
    %94 = arith.mulf %88, %93 : vector<4x256xf32>
    %95 = arith.addf %87, %94 : vector<4x256xf32>
    %c4_i32 = arith.constant 4 : i32
    %96 = tpu.dynamic_rotate %86 by %c4_i32 dim 1 : vector<4x256xf32>, i32 -> vector<4x256xf32>
    %c0_47 = arith.constant 0 : index
    %c1_48 = arith.constant 1 : index
    %97 = vector.load %arg4[%c0_47, %c1_48] : memref<4x11xf32, #tpu.memory_space<vmem>>, vector<4x1xf32>
    %c1_49 = arith.constant 1 : index
    %c0_50 = arith.constant 0 : index
    %98 = vector.load %arg9[%c1_49, %c0_50] : memref<11x256xf32, #tpu.memory_space<vmem>>, vector<1x256xf32>
    %99 = vector.broadcast %97 : vector<4x1xf32> to vector<4x256xf32>
    %100 = vector.broadcast %98 : vector<1x256xf32> to vector<4x256xf32>
    %101 = arith.mulf %99, %100 : vector<4x256xf32>
    %102 = arith.mulf %96, %101 : vector<4x256xf32>
    %103 = arith.addf %95, %102 : vector<4x256xf32>
    %c3_i32 = arith.constant 3 : i32
    %104 = tpu.dynamic_rotate %86 by %c3_i32 dim 1 : vector<4x256xf32>, i32 -> vector<4x256xf32>
    %c0_51 = arith.constant 0 : index
    %c2_52 = arith.constant 2 : index
    %105 = vector.load %arg4[%c0_51, %c2_52] : memref<4x11xf32, #tpu.memory_space<vmem>>, vector<4x1xf32>
    %c2_53 = arith.constant 2 : index
    %c0_54 = arith.constant 0 : index
    %106 = vector.load %arg9[%c2_53, %c0_54] : memref<11x256xf32, #tpu.memory_space<vmem>>, vector<1x256xf32>
    %107 = vector.broadcast %105 : vector<4x1xf32> to vector<4x256xf32>
    %108 = vector.broadcast %106 : vector<1x256xf32> to vector<4x256xf32>
    %109 = arith.mulf %107, %108 : vector<4x256xf32>
    %110 = arith.mulf %104, %109 : vector<4x256xf32>
    %111 = arith.addf %103, %110 : vector<4x256xf32>
    %c2_i32 = arith.constant 2 : i32
    %112 = tpu.dynamic_rotate %86 by %c2_i32 dim 1 : vector<4x256xf32>, i32 -> vector<4x256xf32>
    %c0_55 = arith.constant 0 : index
    %c3_56 = arith.constant 3 : index
    %113 = vector.load %arg4[%c0_55, %c3_56] : memref<4x11xf32, #tpu.memory_space<vmem>>, vector<4x1xf32>
    %c3_57 = arith.constant 3 : index
    %c0_58 = arith.constant 0 : index
    %114 = vector.load %arg9[%c3_57, %c0_58] : memref<11x256xf32, #tpu.memory_space<vmem>>, vector<1x256xf32>
    %115 = vector.broadcast %113 : vector<4x1xf32> to vector<4x256xf32>
    %116 = vector.broadcast %114 : vector<1x256xf32> to vector<4x256xf32>
    %117 = arith.mulf %115, %116 : vector<4x256xf32>
    %118 = arith.mulf %112, %117 : vector<4x256xf32>
    %119 = arith.addf %111, %118 : vector<4x256xf32>
    %c1_i32_59 = arith.constant 1 : i32
    %120 = tpu.dynamic_rotate %86 by %c1_i32_59 dim 1 : vector<4x256xf32>, i32 -> vector<4x256xf32>
    %c0_60 = arith.constant 0 : index
    %c4_61 = arith.constant 4 : index
    %121 = vector.load %arg4[%c0_60, %c4_61] : memref<4x11xf32, #tpu.memory_space<vmem>>, vector<4x1xf32>
    %c4_62 = arith.constant 4 : index
    %c0_63 = arith.constant 0 : index
    %122 = vector.load %arg9[%c4_62, %c0_63] : memref<11x256xf32, #tpu.memory_space<vmem>>, vector<1x256xf32>
    %123 = vector.broadcast %121 : vector<4x1xf32> to vector<4x256xf32>
    %124 = vector.broadcast %122 : vector<1x256xf32> to vector<4x256xf32>
    %125 = arith.mulf %123, %124 : vector<4x256xf32>
    %126 = arith.mulf %120, %125 : vector<4x256xf32>
    %127 = arith.addf %119, %126 : vector<4x256xf32>
    %c0_64 = arith.constant 0 : index
    %c5_65 = arith.constant 5 : index
    %128 = vector.load %arg4[%c0_64, %c5_65] : memref<4x11xf32, #tpu.memory_space<vmem>>, vector<4x1xf32>
    %c5_66 = arith.constant 5 : index
    %c0_67 = arith.constant 0 : index
    %129 = vector.load %arg9[%c5_66, %c0_67] : memref<11x256xf32, #tpu.memory_space<vmem>>, vector<1x256xf32>
    %130 = vector.broadcast %128 : vector<4x1xf32> to vector<4x256xf32>
    %131 = vector.broadcast %129 : vector<1x256xf32> to vector<4x256xf32>
    %132 = arith.mulf %130, %131 : vector<4x256xf32>
    %133 = arith.mulf %86, %132 : vector<4x256xf32>
    %134 = arith.addf %127, %133 : vector<4x256xf32>
    %c255_i32_68 = arith.constant 255 : i32
    %135 = tpu.dynamic_rotate %86 by %c255_i32_68 dim 1 : vector<4x256xf32>, i32 -> vector<4x256xf32>
    %c0_69 = arith.constant 0 : index
    %c6_70 = arith.constant 6 : index
    %136 = vector.load %arg4[%c0_69, %c6_70] : memref<4x11xf32, #tpu.memory_space<vmem>>, vector<4x1xf32>
    %c6_71 = arith.constant 6 : index
    %c0_72 = arith.constant 0 : index
    %137 = vector.load %arg9[%c6_71, %c0_72] : memref<11x256xf32, #tpu.memory_space<vmem>>, vector<1x256xf32>
    %138 = vector.broadcast %136 : vector<4x1xf32> to vector<4x256xf32>
    %139 = vector.broadcast %137 : vector<1x256xf32> to vector<4x256xf32>
    %140 = arith.mulf %138, %139 : vector<4x256xf32>
    %141 = arith.mulf %135, %140 : vector<4x256xf32>
    %142 = arith.addf %134, %141 : vector<4x256xf32>
    %c254_i32 = arith.constant 254 : i32
    %143 = tpu.dynamic_rotate %86 by %c254_i32 dim 1 : vector<4x256xf32>, i32 -> vector<4x256xf32>
    %c0_73 = arith.constant 0 : index
    %c7_74 = arith.constant 7 : index
    %144 = vector.load %arg4[%c0_73, %c7_74] : memref<4x11xf32, #tpu.memory_space<vmem>>, vector<4x1xf32>
    %c7_75 = arith.constant 7 : index
    %c0_76 = arith.constant 0 : index
    %145 = vector.load %arg9[%c7_75, %c0_76] : memref<11x256xf32, #tpu.memory_space<vmem>>, vector<1x256xf32>
    %146 = vector.broadcast %144 : vector<4x1xf32> to vector<4x256xf32>
    %147 = vector.broadcast %145 : vector<1x256xf32> to vector<4x256xf32>
    %148 = arith.mulf %146, %147 : vector<4x256xf32>
    %149 = arith.mulf %143, %148 : vector<4x256xf32>
    %150 = arith.addf %142, %149 : vector<4x256xf32>
    %c253_i32 = arith.constant 253 : i32
    %151 = tpu.dynamic_rotate %86 by %c253_i32 dim 1 : vector<4x256xf32>, i32 -> vector<4x256xf32>
    %c0_77 = arith.constant 0 : index
    %c8_78 = arith.constant 8 : index
    %152 = vector.load %arg4[%c0_77, %c8_78] : memref<4x11xf32, #tpu.memory_space<vmem>>, vector<4x1xf32>
    %c8_79 = arith.constant 8 : index
    %c0_80 = arith.constant 0 : index
    %153 = vector.load %arg9[%c8_79, %c0_80] : memref<11x256xf32, #tpu.memory_space<vmem>>, vector<1x256xf32>
    %154 = vector.broadcast %152 : vector<4x1xf32> to vector<4x256xf32>
    %155 = vector.broadcast %153 : vector<1x256xf32> to vector<4x256xf32>
    %156 = arith.mulf %154, %155 : vector<4x256xf32>
    %157 = arith.mulf %151, %156 : vector<4x256xf32>
    %158 = arith.addf %150, %157 : vector<4x256xf32>
    %c252_i32 = arith.constant 252 : i32
    %159 = tpu.dynamic_rotate %86 by %c252_i32 dim 1 : vector<4x256xf32>, i32 -> vector<4x256xf32>
    %c0_81 = arith.constant 0 : index
    %c9 = arith.constant 9 : index
    %160 = vector.load %arg4[%c0_81, %c9] : memref<4x11xf32, #tpu.memory_space<vmem>>, vector<4x1xf32>
    %c9_82 = arith.constant 9 : index
    %c0_83 = arith.constant 0 : index
    %161 = vector.load %arg9[%c9_82, %c0_83] : memref<11x256xf32, #tpu.memory_space<vmem>>, vector<1x256xf32>
    %162 = vector.broadcast %160 : vector<4x1xf32> to vector<4x256xf32>
    %163 = vector.broadcast %161 : vector<1x256xf32> to vector<4x256xf32>
    %164 = arith.mulf %162, %163 : vector<4x256xf32>
    %165 = arith.mulf %159, %164 : vector<4x256xf32>
    %166 = arith.addf %158, %165 : vector<4x256xf32>
    %c251_i32 = arith.constant 251 : i32
    %167 = tpu.dynamic_rotate %86 by %c251_i32 dim 1 : vector<4x256xf32>, i32 -> vector<4x256xf32>
    %c0_84 = arith.constant 0 : index
    %c10 = arith.constant 10 : index
    %168 = vector.load %arg4[%c0_84, %c10] : memref<4x11xf32, #tpu.memory_space<vmem>>, vector<4x1xf32>
    %c10_85 = arith.constant 10 : index
    %c0_86 = arith.constant 0 : index
    %169 = vector.load %arg9[%c10_85, %c0_86] : memref<11x256xf32, #tpu.memory_space<vmem>>, vector<1x256xf32>
    %170 = vector.broadcast %168 : vector<4x1xf32> to vector<4x256xf32>
    %171 = vector.broadcast %169 : vector<1x256xf32> to vector<4x256xf32>
    %172 = arith.mulf %170, %171 : vector<4x256xf32>
    %173 = arith.mulf %167, %172 : vector<4x256xf32>
    %174 = arith.addf %166, %173 : vector<4x256xf32>
    %c0_87 = arith.constant 0 : index
    %c0_88 = arith.constant 0 : index
    %175 = vector.load %arg5[%c0_87, %c0_88] : memref<4x1xf32, #tpu.memory_space<vmem>>, vector<4x1xf32>
    %176 = vector.broadcast %175 : vector<4x1xf32> to vector<4x256xf32>
    %177 = arith.addf %174, %176 : vector<4x256xf32>
    %c0_89 = arith.constant 0 : index
    %c24_90 = arith.constant 24 : index
    %c0_91 = arith.constant 0 : index
    %178 = vector.load %arg11[%c0_89, %c24_90, %c0_91] : memref<1x32x256xf32, #tpu.memory_space<vmem>>, vector<1x4x256xf32>
    %179 = vector.shape_cast %178 : vector<1x4x256xf32> to vector<4x256xf32>
    %180 = vector.shape_cast %177 : vector<4x256xf32> to vector<1x4x256xf32>
    tpu.vector_store %arg11[%c0_89, %c24_90, %c0_91], %180 {strides = array<i32>} : memref<1x32x256xf32, #tpu.memory_space<vmem>>, vector<1x4x256xf32>,
    %c0_92 = arith.constant 0 : index
    %c28 = arith.constant 28 : index
    %c0_93 = arith.constant 0 : index
    %181 = vector.load %arg1[%c0_92, %c28, %c0_93] : memref<1x32x256xf32, #tpu.memory_space<vmem>>, vector<1x4x256xf32>
    %182 = vector.shape_cast %181 : vector<1x4x256xf32> to vector<4x256xf32>
    %cst_94 = arith.constant 0.000000e+00 : f32
    %183 = vector.broadcast %cst_94 : f32 to vector<4x256xf32>
    %c80_i32 = arith.constant 80 : i32
    %184 = tpu.dynamic_rotate %182 by %c80_i32 dim 1 : vector<4x256xf32>, i32 -> vector<4x256xf32>
    %c0_95 = arith.constant 0 : index
    %c0_96 = arith.constant 0 : index
    %185 = vector.load %arg6[%c0_95, %c0_96] : memref<4x11xf32, #tpu.memory_space<vmem>>, vector<4x1xf32>
    %c0_97 = arith.constant 0 : index
    %c0_98 = arith.constant 0 : index
    %186 = vector.load %arg10[%c0_97, %c0_98] : memref<11x256xf32, #tpu.memory_space<vmem>>, vector<1x256xf32>
    %187 = vector.broadcast %185 : vector<4x1xf32> to vector<4x256xf32>
    %188 = vector.broadcast %186 : vector<1x256xf32> to vector<4x256xf32>
    %189 = arith.mulf %187, %188 : vector<4x256xf32>
    %190 = arith.mulf %184, %189 : vector<4x256xf32>
    %191 = arith.addf %183, %190 : vector<4x256xf32>
    %c64_i32 = arith.constant 64 : i32
    %192 = tpu.dynamic_rotate %182 by %c64_i32 dim 1 : vector<4x256xf32>, i32 -> vector<4x256xf32>
    %c0_99 = arith.constant 0 : index
    %c1_100 = arith.constant 1 : index
    %193 = vector.load %arg6[%c0_99, %c1_100] : memref<4x11xf32, #tpu.memory_space<vmem>>, vector<4x1xf32>
    %c1_101 = arith.constant 1 : index
    %c0_102 = arith.constant 0 : index
    %194 = vector.load %arg10[%c1_101, %c0_102] : memref<11x256xf32, #tpu.memory_space<vmem>>, vector<1x256xf32>
    %195 = vector.broadcast %193 : vector<4x1xf32> to vector<4x256xf32>
    %196 = vector.broadcast %194 : vector<1x256xf32> to vector<4x256xf32>
    %197 = arith.mulf %195, %196 : vector<4x256xf32>
    %198 = arith.mulf %192, %197 : vector<4x256xf32>
    %199 = arith.addf %191, %198 : vector<4x256xf32>
    %c48_i32 = arith.constant 48 : i32
    %200 = tpu.dynamic_rotate %182 by %c48_i32 dim 1 : vector<4x256xf32>, i32 -> vector<4x256xf32>
    %c0_103 = arith.constant 0 : index
    %c2_104 = arith.constant 2 : index
    %201 = vector.load %arg6[%c0_103, %c2_104] : memref<4x11xf32, #tpu.memory_space<vmem>>, vector<4x1xf32>
    %c2_105 = arith.constant 2 : index
    %c0_106 = arith.constant 0 : index
    %202 = vector.load %arg10[%c2_105, %c0_106] : memref<11x256xf32, #tpu.memory_space<vmem>>, vector<1x256xf32>
    %203 = vector.broadcast %201 : vector<4x1xf32> to vector<4x256xf32>
    %204 = vector.broadcast %202 : vector<1x256xf32> to vector<4x256xf32>
    %205 = arith.mulf %203, %204 : vector<4x256xf32>
    %206 = arith.mulf %200, %205 : vector<4x256xf32>
    %207 = arith.addf %199, %206 : vector<4x256xf32>
    %c32_i32 = arith.constant 32 : i32
    %208 = tpu.dynamic_rotate %182 by %c32_i32 dim 1 : vector<4x256xf32>, i32 -> vector<4x256xf32>
    %c0_107 = arith.constant 0 : index
    %c3_108 = arith.constant 3 : index
    %209 = vector.load %arg6[%c0_107, %c3_108] : memref<4x11xf32, #tpu.memory_space<vmem>>, vector<4x1xf32>
    %c3_109 = arith.constant 3 : index
    %c0_110 = arith.constant 0 : index
    %210 = vector.load %arg10[%c3_109, %c0_110] : memref<11x256xf32, #tpu.memory_space<vmem>>, vector<1x256xf32>
    %211 = vector.broadcast %209 : vector<4x1xf32> to vector<4x256xf32>
    %212 = vector.broadcast %210 : vector<1x256xf32> to vector<4x256xf32>
    %213 = arith.mulf %211, %212 : vector<4x256xf32>
    %214 = arith.mulf %208, %213 : vector<4x256xf32>
    %215 = arith.addf %207, %214 : vector<4x256xf32>
    %c16_i32_111 = arith.constant 16 : i32
    %216 = tpu.dynamic_rotate %182 by %c16_i32_111 dim 1 : vector<4x256xf32>, i32 -> vector<4x256xf32>
    %c0_112 = arith.constant 0 : index
    %c4_113 = arith.constant 4 : index
    %217 = vector.load %arg6[%c0_112, %c4_113] : memref<4x11xf32, #tpu.memory_space<vmem>>, vector<4x1xf32>
    %c4_114 = arith.constant 4 : index
    %c0_115 = arith.constant 0 : index
    %218 = vector.load %arg10[%c4_114, %c0_115] : memref<11x256xf32, #tpu.memory_space<vmem>>, vector<1x256xf32>
    %219 = vector.broadcast %217 : vector<4x1xf32> to vector<4x256xf32>
    %220 = vector.broadcast %218 : vector<1x256xf32> to vector<4x256xf32>
    %221 = arith.mulf %219, %220 : vector<4x256xf32>
    %222 = arith.mulf %216, %221 : vector<4x256xf32>
    %223 = arith.addf %215, %222 : vector<4x256xf32>
    %c0_116 = arith.constant 0 : index
    %c5_117 = arith.constant 5 : index
    %224 = vector.load %arg6[%c0_116, %c5_117] : memref<4x11xf32, #tpu.memory_space<vmem>>, vector<4x1xf32>
    %c5_118 = arith.constant 5 : index
    %c0_119 = arith.constant 0 : index
    %225 = vector.load %arg10[%c5_118, %c0_119] : memref<11x256xf32, #tpu.memory_space<vmem>>, vector<1x256xf32>
    %226 = vector.broadcast %224 : vector<4x1xf32> to vector<4x256xf32>
    %227 = vector.broadcast %225 : vector<1x256xf32> to vector<4x256xf32>
    %228 = arith.mulf %226, %227 : vector<4x256xf32>
    %229 = arith.mulf %182, %228 : vector<4x256xf32>
    %230 = arith.addf %223, %229 : vector<4x256xf32>
    %c240_i32_120 = arith.constant 240 : i32
    %231 = tpu.dynamic_rotate %182 by %c240_i32_120 dim 1 : vector<4x256xf32>, i32 -> vector<4x256xf32>
    %c0_121 = arith.constant 0 : index
    %c6_122 = arith.constant 6 : index
    %232 = vector.load %arg6[%c0_121, %c6_122] : memref<4x11xf32, #tpu.memory_space<vmem>>, vector<4x1xf32>
    %c6_123 = arith.constant 6 : index
    %c0_124 = arith.constant 0 : index
    %233 = vector.load %arg10[%c6_123, %c0_124] : memref<11x256xf32, #tpu.memory_space<vmem>>, vector<1x256xf32>
    %234 = vector.broadcast %232 : vector<4x1xf32> to vector<4x256xf32>
    %235 = vector.broadcast %233 : vector<1x256xf32> to vector<4x256xf32>
    %236 = arith.mulf %234, %235 : vector<4x256xf32>
    %237 = arith.mulf %231, %236 : vector<4x256xf32>
    %238 = arith.addf %230, %237 : vector<4x256xf32>
    %c224_i32 = arith.constant 224 : i32
    %239 = tpu.dynamic_rotate %182 by %c224_i32 dim 1 : vector<4x256xf32>, i32 -> vector<4x256xf32>
    %c0_125 = arith.constant 0 : index
    %c7_126 = arith.constant 7 : index
    %240 = vector.load %arg6[%c0_125, %c7_126] : memref<4x11xf32, #tpu.memory_space<vmem>>, vector<4x1xf32>
    %c7_127 = arith.constant 7 : index
    %c0_128 = arith.constant 0 : index
    %241 = vector.load %arg10[%c7_127, %c0_128] : memref<11x256xf32, #tpu.memory_space<vmem>>, vector<1x256xf32>
    %242 = vector.broadcast %240 : vector<4x1xf32> to vector<4x256xf32>
    %243 = vector.broadcast %241 : vector<1x256xf32> to vector<4x256xf32>
    %244 = arith.mulf %242, %243 : vector<4x256xf32>
    %245 = arith.mulf %239, %244 : vector<4x256xf32>
    %246 = arith.addf %238, %245 : vector<4x256xf32>
    %c208_i32 = arith.constant 208 : i32
    %247 = tpu.dynamic_rotate %182 by %c208_i32 dim 1 : vector<4x256xf32>, i32 -> vector<4x256xf32>
    %c0_129 = arith.constant 0 : index
    %c8_130 = arith.constant 8 : index
    %248 = vector.load %arg6[%c0_129, %c8_130] : memref<4x11xf32, #tpu.memory_space<vmem>>, vector<4x1xf32>
    %c8_131 = arith.constant 8 : index
    %c0_132 = arith.constant 0 : index
    %249 = vector.load %arg10[%c8_131, %c0_132] : memref<11x256xf32, #tpu.memory_space<vmem>>, vector<1x256xf32>
    %250 = vector.broadcast %248 : vector<4x1xf32> to vector<4x256xf32>
    %251 = vector.broadcast %249 : vector<1x256xf32> to vector<4x256xf32>
    %252 = arith.mulf %250, %251 : vector<4x256xf32>
    %253 = arith.mulf %247, %252 : vector<4x256xf32>
    %254 = arith.addf %246, %253 : vector<4x256xf32>
    %c192_i32 = arith.constant 192 : i32
    %255 = tpu.dynamic_rotate %182 by %c192_i32 dim 1 : vector<4x256xf32>, i32 -> vector<4x256xf32>
    %c0_133 = arith.constant 0 : index
    %c9_134 = arith.constant 9 : index
    %256 = vector.load %arg6[%c0_133, %c9_134] : memref<4x11xf32, #tpu.memory_space<vmem>>, vector<4x1xf32>
    %c9_135 = arith.constant 9 : index
    %c0_136 = arith.constant 0 : index
    %257 = vector.load %arg10[%c9_135, %c0_136] : memref<11x256xf32, #tpu.memory_space<vmem>>, vector<1x256xf32>
    %258 = vector.broadcast %256 : vector<4x1xf32> to vector<4x256xf32>
    %259 = vector.broadcast %257 : vector<1x256xf32> to vector<4x256xf32>
    %260 = arith.mulf %258, %259 : vector<4x256xf32>
    %261 = arith.mulf %255, %260 : vector<4x256xf32>
    %262 = arith.addf %254, %261 : vector<4x256xf32>
    %c176_i32 = arith.constant 176 : i32
    %263 = tpu.dynamic_rotate %182 by %c176_i32 dim 1 : vector<4x256xf32>, i32 -> vector<4x256xf32>
    %c0_137 = arith.constant 0 : index
    %c10_138 = arith.constant 10 : index
    %264 = vector.load %arg6[%c0_137, %c10_138] : memref<4x11xf32, #tpu.memory_space<vmem>>, vector<4x1xf32>
    %c10_139 = arith.constant 10 : index
    %c0_140 = arith.constant 0 : index
    %265 = vector.load %arg10[%c10_139, %c0_140] : memref<11x256xf32, #tpu.memory_space<vmem>>, vector<1x256xf32>
    %266 = vector.broadcast %264 : vector<4x1xf32> to vector<4x256xf32>
    %267 = vector.broadcast %265 : vector<1x256xf32> to vector<4x256xf32>
    %268 = arith.mulf %266, %267 : vector<4x256xf32>
    %269 = arith.mulf %263, %268 : vector<4x256xf32>
    %270 = arith.addf %262, %269 : vector<4x256xf32>
    %c0_141 = arith.constant 0 : index
    %c0_142 = arith.constant 0 : index
    %271 = vector.load %arg7[%c0_141, %c0_142] : memref<4x1xf32, #tpu.memory_space<vmem>>, vector<4x1xf32>
    %272 = vector.broadcast %271 : vector<4x1xf32> to vector<4x256xf32>
    %273 = arith.addf %270, %272 : vector<4x256xf32>
    %c0_143 = arith.constant 0 : index
    %c28_144 = arith.constant 28 : index
    %c0_145 = arith.constant 0 : index
    %274 = vector.load %arg11[%c0_143, %c28_144, %c0_145] : memref<1x32x256xf32, #tpu.memory_space<vmem>>, vector<1x4x256xf32>
    %275 = vector.shape_cast %274 : vector<1x4x256xf32> to vector<4x256xf32>
    %276 = vector.shape_cast %273 : vector<4x256xf32> to vector<1x4x256xf32>
    tpu.vector_store %arg11[%c0_143, %c28_144, %c0_145], %276 {strides = array<i32>} : memref<1x32x256xf32, #tpu.memory_space<vmem>>, vector<1x4x256xf32>,
    return
  }
  func.func @transform_0(%arg0: i32) -> (i32, i32, i32) {
    %c0_i32 = arith.constant 0 : i32
    %c0_i32_0 = arith.constant 0 : i32
    %c0_i32_1 = arith.constant 0 : i32
    return %arg0, %c0_i32, %c0_i32_0 : i32, i32, i32
  }
  func.func @transform_1(%arg0: i32) -> (i32, i32) {
    %c0_i32 = arith.constant 0 : i32
    %c0_i32_0 = arith.constant 0 : i32
    %c0_i32_1 = arith.constant 0 : i32
    return %c0_i32, %c0_i32_0 : i32, i32
  }
  func.func @transform_2(%arg0: i32) -> (i32, i32) {
    %c0_i32 = arith.constant 0 : i32
    %c0_i32_0 = arith.constant 0 : i32
    %c0_i32_1 = arith.constant 0 : i32
    return %c0_i32, %c0_i32_0 : i32, i32
  }
  func.func @transform_3(%arg0: i32) -> (i32, i32) {
    %c0_i32 = arith.constant 0 : i32
    %c0_i32_0 = arith.constant 0 : i32
    %c0_i32_1 = arith.constant 0 : i32
    return %c0_i32, %c0_i32_0 : i32, i32
  }
  func.func @transform_4(%arg0: i32) -> (i32, i32) {
    %c0_i32 = arith.constant 0 : i32
    %c0_i32_0 = arith.constant 0 : i32
    %c0_i32_1 = arith.constant 0 : i32
    return %c0_i32, %c0_i32_0 : i32, i32
  }
  func.func @transform_5(%arg0: i32) -> (i32, i32) {
    %c0_i32 = arith.constant 0 : i32
    %c0_i32_0 = arith.constant 0 : i32
    %c0_i32_1 = arith.constant 0 : i32
    return %c0_i32, %c0_i32_0 : i32, i32
  }
  func.func @transform_6(%arg0: i32) -> (i32, i32) {
    %c0_i32 = arith.constant 0 : i32
    %c0_i32_0 = arith.constant 0 : i32
    %c0_i32_1 = arith.constant 0 : i32
    return %c0_i32, %c0_i32_0 : i32, i32
  }
  func.func @transform_7(%arg0: i32) -> (i32, i32) {
    %c0_i32 = arith.constant 0 : i32
    %c0_i32_0 = arith.constant 0 : i32
    %c0_i32_1 = arith.constant 0 : i32
    return %c0_i32, %c0_i32_0 : i32, i32
  }
  func.func @transform_8(%arg0: i32) -> (i32, i32) {
    %c0_i32 = arith.constant 0 : i32
    %c0_i32_0 = arith.constant 0 : i32
    %c0_i32_1 = arith.constant 0 : i32
    return %c0_i32, %c0_i32_0 : i32, i32
  }
  func.func @transform_9(%arg0: i32) -> (i32, i32) {
    %c0_i32 = arith.constant 0 : i32
    %c0_i32_0 = arith.constant 0 : i32
    %c0_i32_1 = arith.constant 0 : i32
    return %c0_i32, %c0_i32_0 : i32, i32
  }
  func.func @transform_10(%arg0: i32) -> (i32, i32, i32) {
    %c0_i32 = arith.constant 0 : i32
    %c0_i32_0 = arith.constant 0 : i32
    %c0_i32_1 = arith.constant 0 : i32
    return %arg0, %c0_i32, %c0_i32_0 : i32, i32, i32
  }
}

</mosaic_0001>

<llo_original>
// kernel: tpu_custom_call.1
$region0: #{tpu_custom_call.1}
  #allocation0 [shape = 'u32[]', space=smem, size = 0x4, offset = 0x4, fixed_abs, tag = 'smem constant byte address 0x4 - core index']
  #allocation1 [shape = 'u32[144,128]{1,0:T(1,128)}', space=vmem, size = 0x12000, scoped, tag = 'internal scratch']
  %s0 = inlined_call_operand.hbm [shape: f32[2,32,256], index: 0, kind: input, shape index: {}]
  %s1 = inlined_call_operand.vmem [shape: f32[4,9], index: 1, kind: input, shape index: {}]
  %s2 = inlined_call_operand.vmem [shape: f32[4,1], index: 2, kind: input, shape index: {}]
  %s3 = inlined_call_operand.vmem [shape: f32[4,11], index: 3, kind: input, shape index: {}]
  %s4 = inlined_call_operand.vmem [shape: f32[4,1], index: 4, kind: input, shape index: {}]
  %s5 = inlined_call_operand.vmem [shape: f32[4,11], index: 5, kind: input, shape index: {}]
  %s6 = inlined_call_operand.vmem [shape: f32[4,1], index: 6, kind: input, shape index: {}]
  %s7 = inlined_call_operand.hbm [shape: f32[9,256], index: 7, kind: input, shape index: {}]
  %s8 = inlined_call_operand.hbm [shape: f32[11,256], index: 8, kind: input, shape index: {}]
  %s9 = inlined_call_operand.hbm [shape: f32[11,256], index: 9, kind: input, shape index: {}]
  %s10 = inlined_call_operand.hbm [shape: f32[2,32,256], index: 10, kind: output, shape index: {}]
  %s11 = sld [smem:[#allocation0]]
  $region89: #{tpu_custom_call.1} parent=0
    _
  %s13 = ssub.s32 1, %s11
  %s14 = scalar_select 0, %s13, %s11
  $region1: #{tpu_custom_call.1} parent=0
    #allocation2 [shape = 'u8[65536]{0}', space=vmem, size = 0x10000, scoped, tag = 'input window, operand 0']
    #allocation3 [shape = 's32[2]{0}', space=sflag, size = 0x8, scoped, tag = 'scoped memory for tpu_custom_call.1']
    #allocation4 [shape = 's32[2]{0}', space=sflag, size = 0x8, scoped, tag = 'scoped memory for tpu_custom_call.1']
    #allocation5 [shape = 'u8[16384]{0}', space=vmem, size = 0x4000, scoped, tag = 'input window, operand 7, single buffered']
    #allocation6 [shape = 's32[1]{0}', space=sflag, size = 0x4, scoped, tag = 'scoped memory for tpu_custom_call.1']
    #allocation7 [shape = 'u8[16384]{0}', space=vmem, size = 0x4000, scoped, tag = 'input window, operand 8, single buffered']
    #allocation8 [shape = 'u8[16384]{0}', space=vmem, size = 0x4000, scoped, tag = 'input window, operand 9, single buffered']
    #allocation9 [shape = 's32[1]{0}', space=sflag, size = 0x4, scoped, tag = 'scoped memory for tpu_custom_call.1']
    #allocation10 [shape = 'u8[65536]{0}', space=vmem, size = 0x10000, scoped, tag = 'output window, operand 0']
    %15 = vsyncpa [#allocation3], 0
    %s16 = scalar_lea.sflag [#allocation3], 1
    %17 = vsyncpa %s16, 0
    %18 = vsyncpa [#allocation6], 0
    %19 = vsyncpa [#allocation9], 0
    %20 = vsyncpa [#allocation4], 0
    %s21 = scalar_lea.sflag [#allocation4], 1
    %22 = vsyncpa %s21, 0
    loop: start=0, step=1, limit=4
    $region2: #{tpu_custom_call.1} parent=1 // loop_pre_header
      _
    $region3: #{tpu_custom_call.1} parent=1 // loop_header
      %s24 = sphi 0, %s28
      %p25 = scmp.ge.s32.totalorder %s24, 4
      %s34 = sphi 0, %s36
      %s37 = sphi 0, %s34
      %s38 = sphi 0, %s37
      %s54 = sphi 0, %s38
      %s58 = sphi 0, %s58
      %s60 = sphi 0, %s58
      %s61 = sphi 0, %s60
      %s75 = sphi 0, %s61
      %s79 = sphi 0, %s79
      %s81 = sphi 0, %s79
      %s82 = sphi 0, %s81
      %s96 = sphi 0, %s82
      %s100 = sphi 0, %s100
      %s102 = sphi 0, %s100
      %s103 = sphi 0, %s102
      %s117 = sphi 0, %s103
      %s121 = sphi 0, %s121
      %s123 = sphi 0, %s121
      %s124 = sphi 0, %s123
      %s138 = sphi 0, %s124
      %s142 = sphi 0, %s142
      %s144 = sphi 0, %s142
      %s145 = sphi 0, %s144
      %s159 = sphi 0, %s145
      %s163 = sphi 0, %s163
      %s165 = sphi 0, %s163
      %s166 = sphi 0, %s165
      %s180 = sphi 0, %s166
      %s184 = sphi 0, %s184
      %s186 = sphi 0, %s184
      %s187 = sphi 0, %s186
      %s201 = sphi 0, %s187
      %s205 = sphi 0, %s205
      %s207 = sphi 0, %s205
      %s208 = sphi 0, %s207
      %s222 = sphi 0, %s208
      %s226 = sphi 0, %s226
      %s228 = sphi 0, %s226
      %s229 = sphi 0, %s228
      %s243 = sphi 0, %s229
      %s249 = sphi 0, %s251
      %s252 = sphi 0, %s249
      %s253 = sphi 0, %s252
      %s269 = sphi 0, %s253
    $region4: #{tpu_custom_call.1} parent=1 // loop_header_branch
      %27 = sbr.rel (%p25) target = $region8
    $region5: #{tpu_custom_call.1} parent=1 // loop_body
      %s29 = ssub.s32 %s24, 1
      %s30 = ssub.s32 %s24, 2
      %s31 = sadd.s32 %s24, 1
      %s32 = ssub.s32 %s24, %s31
      %p33 = scmp.eq.s32.totalorder %s32, 0
      %s35 = sadd.s32 %s34, 1
      %s36 = scalar_select %p33, %s34, %s35
      %p39 = pneg %p33
      %p40 = scmp.eq.s32.totalorder %s24, 1
      %p41 = por %p39, %p40
      %p42 = scmp.ne.s32.totalorder %s34, %s37
      %p43 = scmp.eq.s32.totalorder %s24, 0
      %p44 = por %p42, %p43
      %p45 = scmp.ne.s32.totalorder %s34, %s37
      %p46 = scmp.eq.s32.totalorder %s29, 1
      %p47 = por %p45, %p46
      %p48 = scmp.ne.s32.totalorder %s37, %s38
      %p49 = scmp.eq.s32.totalorder %s29, 0
      %p50 = por %p48, %p49
      %p51 = scmp.ne.s32.totalorder %s37, %s38
      %p52 = scmp.eq.s32.totalorder %s30, 1
      %p53 = por %p51, %p52
      %p55 = scmp.ne.s32.totalorder %s38, %s54
      %p56 = scmp.eq.s32.totalorder %s30, 0
      %p57 = por %p55, %p56
      %s59 = sadd.s32 %s58, 1
      %p62 = scmp.eq.s32.totalorder %s24, 1
      %p63 = scmp.ne.s32.totalorder %s58, %s60
      %p64 = scmp.eq.s32.totalorder %s24, 0
      %p65 = por %p63, %p64
      %p66 = scmp.ne.s32.totalorder %s58, %s60
      %p67 = scmp.eq.s32.totalorder %s29, 1
      %p68 = por %p66, %p67
      %p69 = scmp.ne.s32.totalorder %s60, %s61
      %p70 = scmp.eq.s32.totalorder %s29, 0
      %p71 = por %p69, %p70
      %p72 = scmp.ne.s32.totalorder %s60, %s61
      %p73 = scmp.eq.s32.totalorder %s30, 1
      %p74 = por %p72, %p73
      %p76 = scmp.ne.s32.totalorder %s61, %s75
      %p77 = scmp.eq.s32.totalorder %s30, 0
      %p78 = por %p76, %p77
      %s80 = sadd.s32 %s79, 1
      %p83 = scmp.eq.s32.totalorder %s24, 1
      %p84 = scmp.ne.s32.totalorder %s79, %s81
      %p85 = scmp.eq.s32.totalorder %s24, 0
      %p86 = por %p84, %p85
      %p87 = scmp.ne.s32.totalorder %s79, %s81
      %p88 = scmp.eq.s32.totalorder %s29, 1
      %p89 = por %p87, %p88
      %p90 = scmp.ne.s32.totalorder %s81, %s82
      %p91 = scmp.eq.s32.totalorder %s29, 0
      %p92 = por %p90, %p91
      %p93 = scmp.ne.s32.totalorder %s81, %s82
      %p94 = scmp.eq.s32.totalorder %s30, 1
      %p95 = por %p93, %p94
      %p97 = scmp.ne.s32.totalorder %s82, %s96
      %p98 = scmp.eq.s32.totalorder %s30, 0
      %p99 = por %p97, %p98
      %s101 = sadd.s32 %s100, 1
      %p104 = scmp.eq.s32.totalorder %s24, 1
      %p105 = scmp.ne.s32.totalorder %s100, %s102
      %p106 = scmp.eq.s32.totalorder %s24, 0
      %p107 = por %p105, %p106
      %p108 = scmp.ne.s32.totalorder %s100, %s102
      %p109 = scmp.eq.s32.totalorder %s29, 1
      %p110 = por %p108, %p109
      %p111 = scmp.ne.s32.totalorder %s102, %s103
      %p112 = scmp.eq.s32.totalorder %s29, 0
      %p113 = por %p111, %p112
      %p114 = scmp.ne.s32.totalorder %s102, %s103
      %p115 = scmp.eq.s32.totalorder %s30, 1
      %p116 = por %p114, %p115
      %p118 = scmp.ne.s32.totalorder %s103, %s117
      %p119 = scmp.eq.s32.totalorder %s30, 0
      %p120 = por %p118, %p119
      %s122 = sadd.s32 %s121, 1
      %p125 = scmp.eq.s32.totalorder %s24, 1
      %p126 = scmp.ne.s32.totalorder %s121, %s123
      %p127 = scmp.eq.s32.totalorder %s24, 0
      %p128 = por %p126, %p127
      %p129 = scmp.ne.s32.totalorder %s121, %s123
      %p130 = scmp.eq.s32.totalorder %s29, 1
      %p131 = por %p129, %p130
      %p132 = scmp.ne.s32.totalorder %s123, %s124
      %p133 = scmp.eq.s32.totalorder %s29, 0
      %p134 = por %p132, %p133
      %p135 = scmp.ne.s32.totalorder %s123, %s124
      %p136 = scmp.eq.s32.totalorder %s30, 1
      %p137 = por %p135, %p136
      %p139 = scmp.ne.s32.totalorder %s124, %s138
      %p140 = scmp.eq.s32.totalorder %s30, 0
      %p141 = por %p139, %p140
      %s143 = sadd.s32 %s142, 1
      %p146 = scmp.eq.s32.totalorder %s24, 1
      %p147 = scmp.ne.s32.totalorder %s142, %s144
      %p148 = scmp.eq.s32.totalorder %s24, 0
      %p149 = por %p147, %p148
      %p150 = scmp.ne.s32.totalorder %s142, %s144
      %p151 = scmp.eq.s32.totalorder %s29, 1
      %p152 = por %p150, %p151
      %p153 = scmp.ne.s32.totalorder %s144, %s145
      %p154 = scmp.eq.s32.totalorder %s29, 0
      %p155 = por %p153, %p154
      %p156 = scmp.ne.s32.totalorder %s144, %s145
      %p157 = scmp.eq.s32.totalorder %s30, 1
      %p158 = por %p156, %p157
      %p160 = scmp.ne.s32.totalorder %s145, %s159
      %p161 = scmp.eq.s32.totalorder %s30, 0
      %p162 = por %p160, %p161
      %s164 = sadd.s32 %s163, 1
      %p167 = scmp.eq.s32.totalorder %s24, 1
      %p168 = scmp.ne.s32.totalorder %s163, %s165
      %p169 = scmp.eq.s32.totalorder %s24, 0
      %p170 = por %p168, %p169
      %p171 = scmp.ne.s32.totalorder %s163, %s165
      %p172 = scmp.eq.s32.totalorder %s29, 1
      %p173 = por %p171, %p172
      %p174 = scmp.ne.s32.totalorder %s165, %s166
      %p175 = scmp.eq.s32.totalorder %s29, 0
      %p176 = por %p174, %p175
      %p177 = scmp.ne.s32.totalorder %s165, %s166
      %p178 = scmp.eq.s32.totalorder %s30, 1
      %p179 = por %p177, %p178
      %p181 = scmp.ne.s32.totalorder %s166, %s180
      %p182 = scmp.eq.s32.totalorder %s30, 0
      %p183 = por %p181, %p182
      %s185 = sadd.s32 %s184, 1
      %p188 = scmp.eq.s32.totalorder %s24, 1
      %p189 = scmp.ne.s32.totalorder %s184, %s186
      %p190 = scmp.eq.s32.totalorder %s24, 0
      %p191 = por %p189, %p190
      %p192 = scmp.ne.s32.totalorder %s184, %s186
      %p193 = scmp.eq.s32.totalorder %s29, 1
      %p194 = por %p192, %p193
      %p195 = scmp.ne.s32.totalorder %s186, %s187
      %p196 = scmp.eq.s32.totalorder %s29, 0
      %p197 = por %p195, %p196
      %p198 = scmp.ne.s32.totalorder %s186, %s187
      %p199 = scmp.eq.s32.totalorder %s30, 1
      %p200 = por %p198, %p199
      %p202 = scmp.ne.s32.totalorder %s187, %s201
      %p203 = scmp.eq.s32.totalorder %s30, 0
      %p204 = por %p202, %p203
      %s206 = sadd.s32 %s205, 1
      %p209 = scmp.eq.s32.totalorder %s24, 1
      %p210 = scmp.ne.s32.totalorder %s205, %s207
      %p211 = scmp.eq.s32.totalorder %s24, 0
      %p212 = por %p210, %p211
      %p213 = scmp.ne.s32.totalorder %s205, %s207
      %p214 = scmp.eq.s32.totalorder %s29, 1
      %p215 = por %p213, %p214
      %p216 = scmp.ne.s32.totalorder %s207, %s208
      %p217 = scmp.eq.s32.totalorder %s29, 0
      %p218 = por %p216, %p217
      %p219 = scmp.ne.s32.totalorder %s207, %s208
      %p220 = scmp.eq.s32.totalorder %s30, 1
      %p221 = por %p219, %p220
      %p223 = scmp.ne.s32.totalorder %s208, %s222
      %p224 = scmp.eq.s32.totalorder %s30, 0
      %p225 = por %p223, %p224
      %s227 = sadd.s32 %s226, 1
      %p230 = scmp.eq.s32.totalorder %s24, 1
      %p231 = scmp.ne.s32.totalorder %s226, %s228
      %p232 = scmp.eq.s32.totalorder %s24, 0
      %p233 = por %p231, %p232
      %p234 = scmp.ne.s32.totalorder %s226, %s228
      %p235 = scmp.eq.s32.totalorder %s29, 1
      %p236 = por %p234, %p235
      %p237 = scmp.ne.s32.totalorder %s228, %s229
      %p238 = scmp.eq.s32.totalorder %s29, 0
      %p239 = por %p237, %p238
      %p240 = scmp.ne.s32.totalorder %s228, %s229
      %p241 = scmp.eq.s32.totalorder %s30, 1
      %p242 = por %p240, %p241
      %p244 = scmp.ne.s32.totalorder %s229, %s243
      %p245 = scmp.eq.s32.totalorder %s30, 0
      %p246 = por %p244, %p245
      %s247 = ssub.s32 %s24, %s31
      %p248 = scmp.eq.s32.totalorder %s247, 0
      %s250 = sadd.s32 %s249, 1
      %s251 = scalar_select %p248, %s249, %s250
      %p254 = pneg %p248
      %p255 = scmp.eq.s32.totalorder %s24, 1
      %p256 = por %p254, %p255
      %p257 = scmp.ne.s32.totalorder %s249, %s252
      %p258 = scmp.eq.s32.totalorder %s24, 0
      %p259 = por %p257, %p258
      %p260 = scmp.ne.s32.totalorder %s249, %s252
      %p261 = scmp.eq.s32.totalorder %s29, 1
      %p262 = por %p260, %p261
      %p263 = scmp.ne.s32.totalorder %s252, %s253
      %p264 = scmp.eq.s32.totalorder %s29, 0
      %p265 = por %p263, %p264
      %p266 = scmp.ne.s32.totalorder %s252, %s253
      %p267 = scmp.eq.s32.totalorder %s30, 1
      %p268 = por %p266, %p267
      %p270 = scmp.ne.s32.totalorder %s253, %s269
      %p271 = scmp.eq.s32.totalorder %s30, 0
      %p272 = por %p270, %p271
      %p273 = scmp.le.s32.totalorder 1, %s24
      %p274 = scmp.lt.s32.totalorder %s24, 3
      %p275 = pnand %p273, %p274
      %p276 = pneg %p275
      // Predicated region
      $region9: #{tpu_custom_call.1} parent=5 // pred_check
        _
      $region10: #{tpu_custom_call.1} parent=5 // pred_check_branch
        %278 = sbr.rel (%p275) target = $region12
      $region11: #{tpu_custom_call.1} parent=5 // pred_region
        %s279 = ssub.s32 %s24, 1
        // Predicated region
        $region13: #{tpu_custom_call.1} parent=11 // pred_check
          %p280 = pneg %p71
        $region14: #{tpu_custom_call.1} parent=11 // pred_check_branch
          %282 = sbr.rel (%p280) target = $region16
        $region15: #{tpu_custom_call.1} parent=11 // pred_region
          _
        $region16: #{tpu_custom_call.1} parent=11 // pred_fallthru
          _
        // Predicated region
        $region17: #{tpu_custom_call.1} parent=11 // pred_check
          %p283 = pneg %p92
        $region18: #{tpu_custom_call.1} parent=11 // pred_check_branch
          %285 = sbr.rel (%p283) target = $region20
        $region19: #{tpu_custom_call.1} parent=11 // pred_region
          _
        $region20: #{tpu_custom_call.1} parent=11 // pred_fallthru
          _
        // Predicated region
        $region21: #{tpu_custom_call.1} parent=11 // pred_check
          %p286 = pneg %p113
        $region22: #{tpu_custom_call.1} parent=11 // pred_check_branch
          %288 = sbr.rel (%p286) target = $region24
        $region23: #{tpu_custom_call.1} parent=11 // pred_region
          _
        $region24: #{tpu_custom_call.1} parent=11 // pred_fallthru
          _
        // Predicated region
        $region25: #{tpu_custom_call.1} parent=11 // pred_check
          %p289 = pneg %p134
        $region26: #{tpu_custom_call.1} parent=11 // pred_check_branch
          %291 = sbr.rel (%p289) target = $region28
        $region27: #{tpu_custom_call.1} parent=11 // pred_region
          _
        $region28: #{tpu_custom_call.1} parent=11 // pred_fallthru
          _
        // Predicated region
        $region29: #{tpu_custom_call.1} parent=11 // pred_check
          %p292 = pneg %p155
        $region30: #{tpu_custom_call.1} parent=11 // pred_check_branch
          %294 = sbr.rel (%p292) target = $region32
        $region31: #{tpu_custom_call.1} parent=11 // pred_region
          _
        $region32: #{tpu_custom_call.1} parent=11 // pred_fallthru
          _
        // Predicated region
        $region33: #{tpu_custom_call.1} parent=11 // pred_check
          %p295 = pneg %p176
        $region34: #{tpu_custom_call.1} parent=11 // pred_check_branch
          %297 = sbr.rel (%p295) target = $region36
        $region35: #{tpu_custom_call.1} parent=11 // pred_region
          _
        $region36: #{tpu_custom_call.1} parent=11 // pred_fallthru
          _
        // Predicated region
        $region37: #{tpu_custom_call.1} parent=11 // pred_check
          %p298 = pneg %p197
        $region38: #{tpu_custom_call.1} parent=11 // pred_check_branch
          %300 = sbr.rel (%p298) target = $region40
        $region39: #{tpu_custom_call.1} parent=11 // pred_region
          %s302 = ssub.s32 512, 512
          %303 = vsyncadd [#allocation6], %s302
          %s304 = sshll.u32 [#allocation5], 4
          %s305 = int_to_ptr.vmem [resolvable:$true] %s304
          %310 = dma.hbm_to_vmem [thread:$0]  %s7, 512, %s305, [#allocation6], 256, 256, 16
        $region40: #{tpu_custom_call.1} parent=11 // pred_fallthru
          _
        // Predicated region
        $region41: #{tpu_custom_call.1} parent=11 // pred_check
          %p311 = pneg %p218
        $region42: #{tpu_custom_call.1} parent=11 // pred_check_branch
          %313 = sbr.rel (%p311) target = $region44
        $region43: #{tpu_custom_call.1} parent=11 // pred_region
          %s315 = ssub.s32 512, 512
          %316 = vsyncadd [#allocation6], %s315
          %s317 = sshll.u32 [#allocation7], 4
          %s318 = int_to_ptr.vmem [resolvable:$true] %s317
          %323 = dma.hbm_to_vmem [thread:$0]  %s8, 512, %s318, [#allocation6], 256, 256, 16
        $region44: #{tpu_custom_call.1} parent=11 // pred_fallthru
          _
        // Predicated region
        $region45: #{tpu_custom_call.1} parent=11 // pred_check
          %p324 = pneg %p239
        $region46: #{tpu_custom_call.1} parent=11 // pred_check_branch
          %326 = sbr.rel (%p324) target = $region48
        $region47: #{tpu_custom_call.1} parent=11 // pred_region
          %s328 = ssub.s32 512, 512
          %329 = vsyncadd [#allocation9], %s328
          %s330 = sshll.u32 [#allocation8], 4
          %s331 = int_to_ptr.vmem [resolvable:$true] %s330
          %336 = dma.hbm_to_vmem [thread:$0]  %s9, 512, %s331, [#allocation9], 256, 256, 16
        $region48: #{tpu_custom_call.1} parent=11 // pred_fallthru
          _
      $region12: #{tpu_custom_call.1} parent=5 // pred_fallthru
        _
      %p337 = scmp.lt.s32.totalorder %s24, 2
      // Predicated region
      $region49: #{tpu_custom_call.1} parent=5 // pred_check
        %p338 = pneg %p337
      $region50: #{tpu_custom_call.1} parent=5 // pred_check_branch
        %340 = sbr.rel (%p338) target = $region52
      $region51: #{tpu_custom_call.1} parent=5 // pred_region
        // Predicated region
        $region53: #{tpu_custom_call.1} parent=51 // pred_check
          %p341 = pneg %p44
        $region54: #{tpu_custom_call.1} parent=51 // pred_check_branch
          %343 = sbr.rel (%p341) target = $region56
        $region55: #{tpu_custom_call.1} parent=51 // pred_region
          %s344 = sand.u32 %s34, 1
          %s345 = scalar_lea.sflag [#allocation3], %s344
          %s346 = sand.u32 %s34, 1
          %s347 = smul.addr %s346, 64
          %s348 = scalar_lea.vmem [#allocation2], %s347
          %s350 = ssub.s32 1024, 1024
          %351 = vsyncadd %s345, %s350
          %s352 = smul.addr %s24, 8
          %s353 = smul.addr %s352, 128
          %s354 = scalar_lea.hbm %s0, %s353
          %s355 = sshll.u32 %s348, 4
          %s356 = int_to_ptr.vmem [resolvable:$true] %s355
          %361 = dma.hbm_to_vmem [thread:$0]  %s354, 1024, %s356, %s345, 256, 256, 16
        $region56: #{tpu_custom_call.1} parent=51 // pred_fallthru
          _
      $region52: #{tpu_custom_call.1} parent=5 // pred_fallthru
        _
      %p362 = scmp.le.s32.totalorder 1, %s24
      %p363 = scmp.lt.s32.totalorder %s24, 3
      %p364 = pnand %p362, %p363
      %p365 = pneg %p364
      // Predicated region
      $region57: #{tpu_custom_call.1} parent=5 // pred_check
        _
      $region58: #{tpu_custom_call.1} parent=5 // pred_check_branch
        %367 = sbr.rel (%p364) target = $region60
      $region59: #{tpu_custom_call.1} parent=5 // pred_region
        %s368 = ssub.s32 %s24, 1
        %s369 = sand.u32 %s37, 1
        %s370 = scalar_lea.sflag [#allocation3], %s369
        %s371 = sand.u32 %s37, 1
        %s372 = smul.addr %s371, 64
        %s373 = scalar_lea.vmem [#allocation2], %s372
        // Predicated region
        $region61: #{tpu_custom_call.1} parent=59 // pred_check
          %p374 = pneg %p50
        $region62: #{tpu_custom_call.1} parent=59 // pred_check_branch
          %376 = sbr.rel (%p374) target = $region64
        $region63: #{tpu_custom_call.1} parent=59 // pred_region
          %377 = dma.done %s370, 1024
        $region64: #{tpu_custom_call.1} parent=59 // pred_fallthru
          _
        // Predicated region
        $region65: #{tpu_custom_call.1} parent=59 // pred_check
          %p378 = pneg %p197
        $region66: #{tpu_custom_call.1} parent=59 // pred_check_branch
          %380 = sbr.rel (%p378) target = $region68
        $region67: #{tpu_custom_call.1} parent=59 // pred_region
          %381 = dma.done [#allocation6], 512
        $region68: #{tpu_custom_call.1} parent=59 // pred_fallthru
          _
        // Predicated region
        $region69: #{tpu_custom_call.1} parent=59 // pred_check
          %p382 = pneg %p218
        $region70: #{tpu_custom_call.1} parent=59 // pred_check_branch
          %384 = sbr.rel (%p382) target = $region72
        $region71: #{tpu_custom_call.1} parent=59 // pred_region
          %385 = dma.done [#allocation6], 512
        $region72: #{tpu_custom_call.1} parent=59 // pred_fallthru
          _
        // Predicated region
        $region73: #{tpu_custom_call.1} parent=59 // pred_check
          %p386 = pneg %p239
        $region74: #{tpu_custom_call.1} parent=59 // pred_check_branch
          %388 = sbr.rel (%p386) target = $region76
        $region75: #{tpu_custom_call.1} parent=59 // pred_region
          %389 = dma.done [#allocation9], 512
        $region76: #{tpu_custom_call.1} parent=59 // pred_fallthru
          _
        %s390 = sand.u32 %s37, 1
        %s391 = scalar_lea.sflag [#allocation3], %s390
        %s392 = sand.u32 %s37, 1
        %s393 = smul.addr %s392, 64
        %s394 = scalar_lea.vmem [#allocation2], %s393
        %p395 = pneg %p50
        %p396 = pneg %p47
        %p397 = pneg %p71
        %p398 = pneg %p68
        %p399 = pneg %p92
        %p400 = pneg %p89
        %p401 = pneg %p113
        %p402 = pneg %p110
        %p403 = pneg %p134
        %p404 = pneg %p131
        %p405 = pneg %p155
        %p406 = pneg %p152
        %p407 = pneg %p176
        %p408 = pneg %p173
        %p409 = pneg %p197
        %p410 = pneg %p194
        %p411 = pneg %p218
        %p412 = pneg %p215
        %p413 = pneg %p239
        %p414 = pneg %p236
        %p415 = pneg %p265
        %p416 = pneg %p262
        %s417 = sand.u32 %s252, 1
        %s418 = scalar_lea.sflag [#allocation4], %s417
        %s419 = sand.u32 %s252, 1
        %s420 = smul.addr %s419, 64
        %s421 = scalar_lea.vmem [#allocation10], %s420
        %v422 = vld [vmem:[%s373] sm:$0xff]
        %v423 = vld [vmem:[%s373 + $0x8] sm:$0xff]
        %v424 = vld [vmem:[%s373 + $0x10] sm:$0xff]
        %v425 = vld [vmem:[%s373 + $0x18] sm:$0xff]
        %v426 = vld [vmem:[%s373 + $0x20] sm:$0xf]
        %v427 = vld [vmem:[%s373 + $0x28] sm:$0xf]
        %428 = vst [vmem:[%s421] sm:$0xff] %v422
        %429 = vst [vmem:[%s421 + $0x8] sm:$0xff] %v423
        %430 = vst [vmem:[%s421 + $0x10] sm:$0xff] %v424
        %431 = vst [vmem:[%s421 + $0x18] sm:$0xff] %v425
        %432 = vst [vmem:[%s421 + $0x20] sm:$0xf] %v426
        %433 = vst [vmem:[%s421 + $0x28] sm:$0xf] %v427
        %v434 = vld [vmem:[%s373 + $0x20] sm:$0xf0]
        %v435 = vld [vmem:[%s373 + $0x28] sm:$0xf0]
        %v438 = vrot.slane %v434, 4
        %v439 = vrot.slane %v435, 4
        %442 = vrot.lane.b32.xlu0 %v438, 17
        %v443 = vpop.permute.xlu0 %442
        %444 = vrot.lane.b32.xlu0 %v439, 17
        %v445 = vpop.permute.xlu0 %444
        %v446 = vlaneseq
        %v447 = vand.u32 %v446, 127
        %vm448 = vcmp.lt.s32.totalorder %v447, 17
        %v449 = vsel %vm448, %v443, %v445
        %v450 = vsel %vm448, %v445, %v443
        %v451 = vld [vmem:[%s1] sm:$0xf]
        %v452 = vld [vmem:[#allocation5] ss:$8 sm:$0x3]
        %454 = vset.pattern.permute.xlu0 0
        %455 = vperm.xlu0 %454, %v451
        %v456 = vpop.permute.xlu0 %455
        %v459 = vlaneseq
        %v460 = vshrl.u32 %v459, 7
        %v461 = vsub.s32 0, %v460
        %v462 = vrot.slane %v452, %v461
        %v463 = vlaneseq
        %v464 = vshrl.u32 %v463, 7
        %v465 = vsub.s32 1, %v464
        %v466 = vrot.slane %v452, %v465
        %v469 = vmul.f32 %v456, %v462
        %v470 = vmul.f32 %v456, %v466
        %v471 = vmul.f32 %v450, %v469
        %v472 = vmul.f32 %v449, %v470
        %v473 = vadd.f32 %v471, 0.0
        %v474 = vadd.f32 %v472, 0.0
        %475 = vrot.lane.b32.xlu0 %v438, 16
        %v476 = vpop.permute.xlu0 %475
        %477 = vrot.lane.b32.xlu0 %v439, 16
        %v478 = vpop.permute.xlu0 %477
        %vm479 = vcmp.lt.s32.totalorder %v447, 16
        %v480 = vsel %vm479, %v476, %v478
        %v481 = vsel %vm479, %v478, %v476
        %s482 = scalar_lea.vmem [#allocation5], 1
        %v483 = vld [vmem:[%s482] ss:$8 sm:$0x3]
        %484 = vset.pattern.permute.xlu0 1
        %485 = vperm.xlu0 %484, %v451
        %v486 = vpop.permute.xlu0 %485
        %v489 = vlaneseq
        %v490 = vshrl.u32 %v489, 7
        %v491 = vsub.s32 0, %v490
        %v492 = vrot.slane %v483, %v491
        %v493 = vlaneseq
        %v494 = vshrl.u32 %v493, 7
        %v495 = vsub.s32 1, %v494
        %v496 = vrot.slane %v483, %v495
        %v499 = vmul.f32 %v486, %v492
        %v500 = vmul.f32 %v486, %v496
        %v501 = vmul.f32 %v481, %v499
        %v502 = vmul.f32 %v480, %v500
        %v503 = vadd.f32 %v473, %v501
        %v504 = vadd.f32 %v474, %v502
        %505 = vrot.lane.b32.xlu0 %v438, 15
        %v506 = vpop.permute.xlu0 %505
        %507 = vrot.lane.b32.xlu0 %v439, 15
        %v508 = vpop.permute.xlu0 %507
        %vm509 = vcmp.lt.s32.totalorder %v447, 15
        %v510 = vsel %vm509, %v506, %v508
        %v511 = vsel %vm509, %v508, %v506
        %s512 = scalar_lea.vmem [#allocation5], 2
        %v513 = vld [vmem:[%s512] ss:$8 sm:$0x3]
        %514 = vset.pattern.permute.xlu0 2
        %515 = vperm.xlu0 %514, %v451
        %v516 = vpop.permute.xlu0 %515
        %v519 = vlaneseq
        %v520 = vshrl.u32 %v519, 7
        %v521 = vsub.s32 0, %v520
        %v522 = vrot.slane %v513, %v521
        %v523 = vlaneseq
        %v524 = vshrl.u32 %v523, 7
        %v525 = vsub.s32 1, %v524
        %v526 = vrot.slane %v513, %v525
        %v529 = vmul.f32 %v516, %v522
        %v530 = vmul.f32 %v516, %v526
        %v531 = vmul.f32 %v511, %v529
        %v532 = vmul.f32 %v510, %v530
        %v533 = vadd.f32 %v503, %v531
        %v534 = vadd.f32 %v504, %v532
        %535 = vrot.lane.b32.xlu0 %v438, 1
        %v536 = vpop.permute.xlu0 %535
        %537 = vrot.lane.b32.xlu0 %v439, 1
        %v538 = vpop.permute.xlu0 %537
        %vm539 = vcmp.lt.s32.totalorder %v447, 1
        %v540 = vsel %vm539, %v536, %v538
        %v541 = vsel %vm539, %v538, %v536
        %s542 = scalar_lea.vmem [#allocation5], 3
        %v543 = vld [vmem:[%s542] ss:$8 sm:$0x3]
        %544 = vset.pattern.permute.xlu0 3
        %545 = vperm.xlu0 %544, %v451
        %v546 = vpop.permute.xlu0 %545
        %v549 = vlaneseq
        %v550 = vshrl.u32 %v549, 7
        %v551 = vsub.s32 0, %v550
        %v552 = vrot.slane %v543, %v551
        %v553 = vlaneseq
        %v554 = vshrl.u32 %v553, 7
        %v555 = vsub.s32 1, %v554
        %v556 = vrot.slane %v543, %v555
        %v559 = vmul.f32 %v546, %v552
        %v560 = vmul.f32 %v546, %v556
        %v561 = vmul.f32 %v541, %v559
        %v562 = vmul.f32 %v540, %v560
        %v563 = vadd.f32 %v533, %v561
        %v564 = vadd.f32 %v534, %v562
        %s565 = scalar_lea.vmem [#allocation5], 4
        %v566 = vld [vmem:[%s565] ss:$8 sm:$0x3]
        %567 = vset.pattern.permute.xlu0 4
        %568 = vperm.xlu0 %567, %v451
        %v569 = vpop.permute.xlu0 %568
        %v572 = vlaneseq
        %v573 = vshrl.u32 %v572, 7
        %v574 = vsub.s32 0, %v573
        %v575 = vrot.slane %v566, %v574
        %v576 = vlaneseq
        %v577 = vshrl.u32 %v576, 7
        %v578 = vsub.s32 1, %v577
        %v579 = vrot.slane %v566, %v578
        %v582 = vmul.f32 %v569, %v575
        %v583 = vmul.f32 %v569, %v579
        %v586 = vrot.slane %v582, 4
        %v587 = vrot.slane %v583, 4
        %v590 = vmul.f32 %v434, %v586
        %v591 = vmul.f32 %v435, %v587
        %v594 = vrot.slane %v590, 4
        %v595 = vrot.slane %v591, 4
        %v598 = vadd.f32 %v563, %v594
        %v599 = vadd.f32 %v564, %v595
        %600 = vrot.lane.b32.xlu0 %v438, 127
        %v601 = vpop.permute.xlu0 %600
        %602 = vrot.lane.b32.xlu0 %v439, 127
        %v603 = vpop.permute.xlu0 %602
        %vm604 = vcmp.lt.s32.totalorder %v447, 127
        %v605 = vsel %vm604, %v601, %v603
        %v606 = vsel %vm604, %v603, %v601
        %s607 = scalar_lea.vmem [#allocation5], 5
        %v608 = vld [vmem:[%s607] ss:$8 sm:$0x3]
        %609 = vset.pattern.permute.xlu0 5
        %610 = vperm.xlu0 %609, %v451
        %v611 = vpop.permute.xlu0 %610
        %v614 = vlaneseq
        %v615 = vshrl.u32 %v614, 7
        %v616 = vsub.s32 0, %v615
        %v617 = vrot.slane %v608, %v616
        %v618 = vlaneseq
        %v619 = vshrl.u32 %v618, 7
        %v620 = vsub.s32 1, %v619
        %v621 = vrot.slane %v608, %v620
        %v624 = vmul.f32 %v611, %v617
        %v625 = vmul.f32 %v611, %v621
        %v626 = vmul.f32 %v605, %v624
        %v627 = vmul.f32 %v606, %v625
        %v628 = vadd.f32 %v598, %v626
        %v629 = vadd.f32 %v599, %v627
        %630 = vrot.lane.b32.xlu0 %v438, 113
        %v631 = vpop.permute.xlu0 %630
        %632 = vrot.lane.b32.xlu0 %v439, 113
        %v633 = vpop.permute.xlu0 %632
        %vm634 = vcmp.lt.s32.totalorder %v447, 113
        %v635 = vsel %vm634, %v631, %v633
        %v636 = vsel %vm634, %v633, %v631
        %s637 = scalar_lea.vmem [#allocation5], 6
        %v638 = vld [vmem:[%s637] ss:$8 sm:$0x3]
        %639 = vset.pattern.permute.xlu0 6
        %640 = vperm.xlu0 %639, %v451
        %v641 = vpop.permute.xlu0 %640
        %v644 = vlaneseq
        %v645 = vshrl.u32 %v644, 7
        %v646 = vsub.s32 0, %v645
        %v647 = vrot.slane %v638, %v646
        %v648 = vlaneseq
        %v649 = vshrl.u32 %v648, 7
        %v650 = vsub.s32 1, %v649
        %v651 = vrot.slane %v638, %v650
        %v654 = vmul.f32 %v641, %v647
        %v655 = vmul.f32 %v641, %v651
        %v656 = vmul.f32 %v635, %v654
        %v657 = vmul.f32 %v636, %v655
        %v658 = vadd.f32 %v628, %v656
        %v659 = vadd.f32 %v629, %v657
        %660 = vrot.lane.b32.xlu0 %v438, 112
        %v661 = vpop.permute.xlu0 %660
        %662 = vrot.lane.b32.xlu0 %v439, 112
        %v663 = vpop.permute.xlu0 %662
        %vm664 = vcmp.lt.s32.totalorder %v447, 112
        %v665 = vsel %vm664, %v661, %v663
        %v666 = vsel %vm664, %v663, %v661
        %s667 = scalar_lea.vmem [#allocation5], 7
        %v668 = vld [vmem:[%s667] ss:$8 sm:$0x3]
        %669 = vset.pattern.permute.xlu0 7
        %670 = vperm.xlu0 %669, %v451
        %v671 = vpop.permute.xlu0 %670
        %v674 = vlaneseq
        %v675 = vshrl.u32 %v674, 7
        %v676 = vsub.s32 0, %v675
        %v677 = vrot.slane %v668, %v676
        %v678 = vlaneseq
        %v679 = vshrl.u32 %v678, 7
        %v680 = vsub.s32 1, %v679
        %v681 = vrot.slane %v668, %v680
        %v684 = vmul.f32 %v671, %v677
        %v685 = vmul.f32 %v671, %v681
        %v686 = vmul.f32 %v665, %v684
        %v687 = vmul.f32 %v666, %v685
        %v688 = vadd.f32 %v658, %v686
        %v689 = vadd.f32 %v659, %v687
        %690 = vrot.lane.b32.xlu0 %v438, 111
        %v691 = vpop.permute.xlu0 %690
        %692 = vrot.lane.b32.xlu0 %v439, 111
        %v693 = vpop.permute.xlu0 %692
        %vm694 = vcmp.lt.s32.totalorder %v447, 111
        %v695 = vsel %vm694, %v691, %v693
        %v696 = vsel %vm694, %v693, %v691
        %s697 = scalar_lea.vmem [#allocation5], 16
        %v698 = vld [vmem:[%s697] ss:$8 sm:$0x3]
        %699 = vset.pattern.permute.xlu0 8
        %700 = vperm.xlu0 %699, %v451
        %v701 = vpop.permute.xlu0 %700
        %v704 = vlaneseq
        %v705 = vshrl.u32 %v704, 7
        %v706 = vsub.s32 0, %v705
        %v707 = vrot.slane %v698, %v706
        %v708 = vlaneseq
        %v709 = vshrl.u32 %v708, 7
        %v710 = vsub.s32 1, %v709
        %v711 = vrot.slane %v698, %v710
        %v714 = vmul.f32 %v701, %v707
        %v715 = vmul.f32 %v701, %v711
        %v716 = vmul.f32 %v695, %v714
        %v717 = vmul.f32 %v696, %v715
        %v718 = vadd.f32 %v688, %v716
        %v719 = vadd.f32 %v689, %v717
        %v720 = vld [vmem:[%s2] sm:$0xf]
        %722 = vset.pattern.permute.xlu0 0
        %723 = vperm.xlu0 %722, %v720
        %v724 = vpop.permute.xlu0 %723
        %v726 = vadd.f32 %v718, %v724
        %v727 = vadd.f32 %v719, %v724
        %v730 = vrot.slane %v726, 4
        %v731 = vrot.slane %v727, 4
        %734 = vst [vmem:[%s421 + $0x20] sm:$0xf0] %v730
        %735 = vst [vmem:[%s421 + $0x28] sm:$0xf0] %v731
        %v736 = vld [vmem:[%s373 + $0x30] sm:$0xf]
        %v737 = vld [vmem:[%s373 + $0x38] sm:$0xf]
        %738 = vrot.lane.b32.xlu0 %v736, 5
        %v739 = vpop.permute.xlu0 %738
        %740 = vrot.lane.b32.xlu0 %v737, 5
        %v741 = vpop.permute.xlu0 %740
        %vm742 = vcmp.lt.s32.totalorder %v447, 5
        %v743 = vsel %vm742, %v739, %v741
        %v744 = vsel %vm742, %v741, %v739
        %v745 = vld [vmem:[%s3] sm:$0xf]
        %v746 = vld [vmem:[#allocation7] ss:$8 sm:$0x3]
        %748 = vset.pattern.permute.xlu0 0
        %749 = vperm.xlu0 %748, %v745
        %v750 = vpop.permute.xlu0 %749
        %v753 = vlaneseq
        %v754 = vshrl.u32 %v753, 7
        %v755 = vsub.s32 0, %v754
        %v756 = vrot.slane %v746, %v755
        %v757 = vlaneseq
        %v758 = vshrl.u32 %v757, 7
        %v759 = vsub.s32 1, %v758
        %v760 = vrot.slane %v746, %v759
        %v763 = vmul.f32 %v750, %v756
        %v764 = vmul.f32 %v750, %v760
        %v765 = vmul.f32 %v744, %v763
        %v766 = vmul.f32 %v743, %v764
        %v767 = vadd.f32 %v765, 0.0
        %v768 = vadd.f32 %v766, 0.0
        %769 = vrot.lane.b32.xlu0 %v736, 4
        %v770 = vpop.permute.xlu0 %769
        %771 = vrot.lane.b32.xlu0 %v737, 4
        %v772 = vpop.permute.xlu0 %771
        %vm773 = vcmp.lt.s32.totalorder %v447, 4
        %v774 = vsel %vm773, %v770, %v772
        %v775 = vsel %vm773, %v772, %v770
        %s776 = scalar_lea.vmem [#allocation7], 1
        %v777 = vld [vmem:[%s776] ss:$8 sm:$0x3]
        %778 = vset.pattern.permute.xlu0 1
        %779 = vperm.xlu0 %778, %v745
        %v780 = vpop.permute.xlu0 %779
        %v783 = vlaneseq
        %v784 = vshrl.u32 %v783, 7
        %v785 = vsub.s32 0, %v784
        %v786 = vrot.slane %v777, %v785
        %v787 = vlaneseq
        %v788 = vshrl.u32 %v787, 7
        %v789 = vsub.s32 1, %v788
        %v790 = vrot.slane %v777, %v789
        %v793 = vmul.f32 %v780, %v786
        %v794 = vmul.f32 %v780, %v790
        %v795 = vmul.f32 %v775, %v793
        %v796 = vmul.f32 %v774, %v794
        %v797 = vadd.f32 %v767, %v795
        %v798 = vadd.f32 %v768, %v796
        %799 = vrot.lane.b32.xlu0 %v736, 3
        %v800 = vpop.permute.xlu0 %799
        %801 = vrot.lane.b32.xlu0 %v737, 3
        %v802 = vpop.permute.xlu0 %801
        %vm803 = vcmp.lt.s32.totalorder %v447, 3
        %v804 = vsel %vm803, %v800, %v802
        %v805 = vsel %vm803, %v802, %v800
        %s806 = scalar_lea.vmem [#allocation7], 2
        %v807 = vld [vmem:[%s806] ss:$8 sm:$0x3]
        %808 = vset.pattern.permute.xlu0 2
        %809 = vperm.xlu0 %808, %v745
        %v810 = vpop.permute.xlu0 %809
        %v813 = vlaneseq
        %v814 = vshrl.u32 %v813, 7
        %v815 = vsub.s32 0, %v814
        %v816 = vrot.slane %v807, %v815
        %v817 = vlaneseq
        %v818 = vshrl.u32 %v817, 7
        %v819 = vsub.s32 1, %v818
        %v820 = vrot.slane %v807, %v819
        %v823 = vmul.f32 %v810, %v816
        %v824 = vmul.f32 %v810, %v820
        %v825 = vmul.f32 %v805, %v823
        %v826 = vmul.f32 %v804, %v824
        %v827 = vadd.f32 %v797, %v825
        %v828 = vadd.f32 %v798, %v826
        %829 = vrot.lane.b32.xlu0 %v736, 2
        %v830 = vpop.permute.xlu0 %829
        %831 = vrot.lane.b32.xlu0 %v737, 2
        %v832 = vpop.permute.xlu0 %831
        %vm833 = vcmp.lt.s32.totalorder %v447, 2
        %v834 = vsel %vm833, %v830, %v832
        %v835 = vsel %vm833, %v832, %v830
        %s836 = scalar_lea.vmem [#allocation7], 3
        %v837 = vld [vmem:[%s836] ss:$8 sm:$0x3]
        %838 = vset.pattern.permute.xlu0 3
        %839 = vperm.xlu0 %838, %v745
        %v840 = vpop.permute.xlu0 %839
        %v843 = vlaneseq
        %v844 = vshrl.u32 %v843, 7
        %v845 = vsub.s32 0, %v844
        %v846 = vrot.slane %v837, %v845
        %v847 = vlaneseq
        %v848 = vshrl.u32 %v847, 7
        %v849 = vsub.s32 1, %v848
        %v850 = vrot.slane %v837, %v849
        %v853 = vmul.f32 %v840, %v846
        %v854 = vmul.f32 %v840, %v850
        %v855 = vmul.f32 %v835, %v853
        %v856 = vmul.f32 %v834, %v854
        %v857 = vadd.f32 %v827, %v855
        %v858 = vadd.f32 %v828, %v856
        %859 = vrot.lane.b32.xlu0 %v736, 1
        %v860 = vpop.permute.xlu0 %859
        %861 = vrot.lane.b32.xlu0 %v737, 1
        %v862 = vpop.permute.xlu0 %861
        %v863 = vsel %vm539, %v860, %v862
        %v864 = vsel %vm539, %v862, %v860
        %s865 = scalar_lea.vmem [#allocation7], 4
        %v866 = vld [vmem:[%s865] ss:$8 sm:$0x3]
        %867 = vset.pattern.permute.xlu0 4
        %868 = vperm.xlu0 %867, %v745
        %v869 = vpop.permute.xlu0 %868
        %v872 = vlaneseq
        %v873 = vshrl.u32 %v872, 7
        %v874 = vsub.s32 0, %v873
        %v875 = vrot.slane %v866, %v874
        %v876 = vlaneseq
        %v877 = vshrl.u32 %v876, 7
        %v878 = vsub.s32 1, %v877
        %v879 = vrot.slane %v866, %v878
        %v882 = vmul.f32 %v869, %v875
        %v883 = vmul.f32 %v869, %v879
        %v884 = vmul.f32 %v864, %v882
        %v885 = vmul.f32 %v863, %v883
        %v886 = vadd.f32 %v857, %v884
        %v887 = vadd.f32 %v858, %v885
        %s888 = scalar_lea.vmem [#allocation7], 5
        %v889 = vld [vmem:[%s888] ss:$8 sm:$0x3]
        %890 = vset.pattern.permute.xlu0 5
        %891 = vperm.xlu0 %890, %v745
        %v892 = vpop.permute.xlu0 %891
        %v895 = vlaneseq
        %v896 = vshrl.u32 %v895, 7
        %v897 = vsub.s32 0, %v896
        %v898 = vrot.slane %v889, %v897
        %v899 = vlaneseq
        %v900 = vshrl.u32 %v899, 7
        %v901 = vsub.s32 1, %v900
        %v902 = vrot.slane %v889, %v901
        %v905 = vmul.f32 %v892, %v898
        %v906 = vmul.f32 %v892, %v902
        %v907 = vmul.f32 %v736, %v905
        %v908 = vmul.f32 %v737, %v906
        %v909 = vadd.f32 %v886, %v907
        %v910 = vadd.f32 %v887, %v908
        %911 = vrot.lane.b32.xlu0 %v736, 127
        %v912 = vpop.permute.xlu0 %911
        %913 = vrot.lane.b32.xlu0 %v737, 127
        %v914 = vpop.permute.xlu0 %913
        %v915 = vsel %vm604, %v912, %v914
        %v916 = vsel %vm604, %v914, %v912
        %s917 = scalar_lea.vmem [#allocation7], 6
        %v918 = vld [vmem:[%s917] ss:$8 sm:$0x3]
        %919 = vset.pattern.permute.xlu0 6
        %920 = vperm.xlu0 %919, %v745
        %v921 = vpop.permute.xlu0 %920
        %v924 = vlaneseq
        %v925 = vshrl.u32 %v924, 7
        %v926 = vsub.s32 0, %v925
        %v927 = vrot.slane %v918, %v926
        %v928 = vlaneseq
        %v929 = vshrl.u32 %v928, 7
        %v930 = vsub.s32 1, %v929
        %v931 = vrot.slane %v918, %v930
        %v934 = vmul.f32 %v921, %v927
        %v935 = vmul.f32 %v921, %v931
        %v936 = vmul.f32 %v915, %v934
        %v937 = vmul.f32 %v916, %v935
        %v938 = vadd.f32 %v909, %v936
        %v939 = vadd.f32 %v910, %v937
        %940 = vrot.lane.b32.xlu0 %v736, 126
        %v941 = vpop.permute.xlu0 %940
        %942 = vrot.lane.b32.xlu0 %v737, 126
        %v943 = vpop.permute.xlu0 %942
        %vm944 = vcmp.lt.s32.totalorder %v447, 126
        %v945 = vsel %vm944, %v941, %v943
        %v946 = vsel %vm944, %v943, %v941
        %s947 = scalar_lea.vmem [#allocation7], 7
        %v948 = vld [vmem:[%s947] ss:$8 sm:$0x3]
        %949 = vset.pattern.permute.xlu0 7
        %950 = vperm.xlu0 %949, %v745
        %v951 = vpop.permute.xlu0 %950
        %v954 = vlaneseq
        %v955 = vshrl.u32 %v954, 7
        %v956 = vsub.s32 0, %v955
        %v957 = vrot.slane %v948, %v956
        %v958 = vlaneseq
        %v959 = vshrl.u32 %v958, 7
        %v960 = vsub.s32 1, %v959
        %v961 = vrot.slane %v948, %v960
        %v964 = vmul.f32 %v951, %v957
        %v965 = vmul.f32 %v951, %v961
        %v966 = vmul.f32 %v945, %v964
        %v967 = vmul.f32 %v946, %v965
        %v968 = vadd.f32 %v938, %v966
        %v969 = vadd.f32 %v939, %v967
        %970 = vrot.lane.b32.xlu0 %v736, 125
        %v971 = vpop.permute.xlu0 %970
        %972 = vrot.lane.b32.xlu0 %v737, 125
        %v973 = vpop.permute.xlu0 %972
        %vm974 = vcmp.lt.s32.totalorder %v447, 125
        %v975 = vsel %vm974, %v971, %v973
        %v976 = vsel %vm974, %v973, %v971
        %s977 = scalar_lea.vmem [#allocation7], 16
        %v978 = vld [vmem:[%s977] ss:$8 sm:$0x3]
        %979 = vset.pattern.permute.xlu0 8
        %980 = vperm.xlu0 %979, %v745
        %v981 = vpop.permute.xlu0 %980
        %v984 = vlaneseq
        %v985 = vshrl.u32 %v984, 7
        %v986 = vsub.s32 0, %v985
        %v987 = vrot.slane %v978, %v986
        %v988 = vlaneseq
        %v989 = vshrl.u32 %v988, 7
        %v990 = vsub.s32 1, %v989
        %v991 = vrot.slane %v978, %v990
        %v994 = vmul.f32 %v981, %v987
        %v995 = vmul.f32 %v981, %v991
        %v996 = vmul.f32 %v975, %v994
        %v997 = vmul.f32 %v976, %v995
        %v998 = vadd.f32 %v968, %v996
        %v999 = vadd.f32 %v969, %v997
        %1000 = vrot.lane.b32.xlu0 %v736, 124
        %v1001 = vpop.permute.xlu0 %1000
        %1002 = vrot.lane.b32.xlu0 %v737, 124
        %v1003 = vpop.permute.xlu0 %1002
        %vm1004 = vcmp.lt.s32.totalorder %v447, 124
        %v1005 = vsel %vm1004, %v1001, %v1003
        %v1006 = vsel %vm1004, %v1003, %v1001
        %s1007 = scalar_lea.vmem [#allocation7], 17
        %v1008 = vld [vmem:[%s1007] ss:$8 sm:$0x3]
        %1009 = vset.pattern.permute.xlu0 9
        %1010 = vperm.xlu0 %1009, %v745
        %v1011 = vpop.permute.xlu0 %1010
        %v1014 = vlaneseq
        %v1015 = vshrl.u32 %v1014, 7
        %v1016 = vsub.s32 0, %v1015
        %v1017 = vrot.slane %v1008, %v1016
        %v1018 = vlaneseq
        %v1019 = vshrl.u32 %v1018, 7
        %v1020 = vsub.s32 1, %v1019
        %v1021 = vrot.slane %v1008, %v1020
        %v1024 = vmul.f32 %v1011, %v1017
        %v1025 = vmul.f32 %v1011, %v1021
        %v1026 = vmul.f32 %v1005, %v1024
        %v1027 = vmul.f32 %v1006, %v1025
        %v1028 = vadd.f32 %v998, %v1026
        %v1029 = vadd.f32 %v999, %v1027
        %1030 = vrot.lane.b32.xlu0 %v736, 123
        %v1031 = vpop.permute.xlu0 %1030
        %1032 = vrot.lane.b32.xlu0 %v737, 123
        %v1033 = vpop.permute.xlu0 %1032
        %vm1034 = vcmp.lt.s32.totalorder %v447, 123
        %v1035 = vsel %vm1034, %v1031, %v1033
        %v1036 = vsel %vm1034, %v1033, %v1031
        %s1037 = scalar_lea.vmem [#allocation7], 18
        %v1038 = vld [vmem:[%s1037] ss:$8 sm:$0x3]
        %1039 = vset.pattern.permute.xlu0 10
        %1040 = vperm.xlu0 %1039, %v745
        %v1041 = vpop.permute.xlu0 %1040
        %v1044 = vlaneseq
        %v1045 = vshrl.u32 %v1044, 7
        %v1046 = vsub.s32 0, %v1045
        %v1047 = vrot.slane %v1038, %v1046
        %v1048 = vlaneseq
        %v1049 = vshrl.u32 %v1048, 7
        %v1050 = vsub.s32 1, %v1049
        %v1051 = vrot.slane %v1038, %v1050
        %v1054 = vmul.f32 %v1041, %v1047
        %v1055 = vmul.f32 %v1041, %v1051
        %v1056 = vmul.f32 %v1035, %v1054
        %v1057 = vmul.f32 %v1036, %v1055
        %v1058 = vadd.f32 %v1028, %v1056
        %v1059 = vadd.f32 %v1029, %v1057
        %v1060 = vld [vmem:[%s4] sm:$0xf]
        %1062 = vset.pattern.permute.xlu0 0
        %1063 = vperm.xlu0 %1062, %v1060
        %v1064 = vpop.permute.xlu0 %1063
        %v1066 = vadd.f32 %v1058, %v1064
        %v1067 = vadd.f32 %v1059, %v1064
        %1068 = vst [vmem:[%s421 + $0x30] sm:$0xf] %v1066
        %1069 = vst [vmem:[%s421 + $0x38] sm:$0xf] %v1067
        %v1070 = vld [vmem:[%s373 + $0x30] sm:$0xf0]
        %v1071 = vld [vmem:[%s373 + $0x38] sm:$0xf0]
        %v1074 = vrot.slane %v1070, 4
        %v1075 = vrot.slane %v1071, 4
        %1078 = vrot.lane.b32.xlu0 %v1074, 80
        %v1079 = vpop.permute.xlu0 %1078
        %1080 = vrot.lane.b32.xlu0 %v1075, 80
        %v1081 = vpop.permute.xlu0 %1080
        %vm1082 = vcmp.lt.s32.totalorder %v447, 80
        %v1083 = vsel %vm1082, %v1079, %v1081
        %v1084 = vsel %vm1082, %v1081, %v1079
        %v1085 = vld [vmem:[%s5] sm:$0xf]
        %v1086 = vld [vmem:[#allocation8] ss:$8 sm:$0x3]
        %1088 = vset.pattern.permute.xlu0 0
        %1089 = vperm.xlu0 %1088, %v1085
        %v1090 = vpop.permute.xlu0 %1089
        %v1093 = vlaneseq
        %v1094 = vshrl.u32 %v1093, 7
        %v1095 = vsub.s32 0, %v1094
        %v1096 = vrot.slane %v1086, %v1095
        %v1097 = vlaneseq
        %v1098 = vshrl.u32 %v1097, 7
        %v1099 = vsub.s32 1, %v1098
        %v1100 = vrot.slane %v1086, %v1099
        %v1103 = vmul.f32 %v1090, %v1096
        %v1104 = vmul.f32 %v1090, %v1100
        %v1105 = vmul.f32 %v1084, %v1103
        %v1106 = vmul.f32 %v1083, %v1104
        %v1107 = vadd.f32 %v1105, 0.0
        %v1108 = vadd.f32 %v1106, 0.0
        %1109 = vrot.lane.b32.xlu0 %v1074, 64
        %v1110 = vpop.permute.xlu0 %1109
        %1111 = vrot.lane.b32.xlu0 %v1075, 64
        %v1112 = vpop.permute.xlu0 %1111
        %vm1113 = vcmp.lt.s32.totalorder %v447, 64
        %v1114 = vsel %vm1113, %v1110, %v1112
        %v1115 = vsel %vm1113, %v1112, %v1110
        %s1116 = scalar_lea.vmem [#allocation8], 1
        %v1117 = vld [vmem:[%s1116] ss:$8 sm:$0x3]
        %1118 = vset.pattern.permute.xlu0 1
        %1119 = vperm.xlu0 %1118, %v1085
        %v1120 = vpop.permute.xlu0 %1119
        %v1123 = vlaneseq
        %v1124 = vshrl.u32 %v1123, 7
        %v1125 = vsub.s32 0, %v1124
        %v1126 = vrot.slane %v1117, %v1125
        %v1127 = vlaneseq
        %v1128 = vshrl.u32 %v1127, 7
        %v1129 = vsub.s32 1, %v1128
        %v1130 = vrot.slane %v1117, %v1129
        %v1133 = vmul.f32 %v1120, %v1126
        %v1134 = vmul.f32 %v1120, %v1130
        %v1135 = vmul.f32 %v1115, %v1133
        %v1136 = vmul.f32 %v1114, %v1134
        %v1137 = vadd.f32 %v1107, %v1135
        %v1138 = vadd.f32 %v1108, %v1136
        %1139 = vrot.lane.b32.xlu0 %v1074, 48
        %v1140 = vpop.permute.xlu0 %1139
        %1141 = vrot.lane.b32.xlu0 %v1075, 48
        %v1142 = vpop.permute.xlu0 %1141
        %vm1143 = vcmp.lt.s32.totalorder %v447, 48
        %v1144 = vsel %vm1143, %v1140, %v1142
        %v1145 = vsel %vm1143, %v1142, %v1140
        %s1146 = scalar_lea.vmem [#allocation8], 2
        %v1147 = vld [vmem:[%s1146] ss:$8 sm:$0x3]
        %1148 = vset.pattern.permute.xlu0 2
        %1149 = vperm.xlu0 %1148, %v1085
        %v1150 = vpop.permute.xlu0 %1149
        %v1153 = vlaneseq
        %v1154 = vshrl.u32 %v1153, 7
        %v1155 = vsub.s32 0, %v1154
        %v1156 = vrot.slane %v1147, %v1155
        %v1157 = vlaneseq
        %v1158 = vshrl.u32 %v1157, 7
        %v1159 = vsub.s32 1, %v1158
        %v1160 = vrot.slane %v1147, %v1159
        %v1163 = vmul.f32 %v1150, %v1156
        %v1164 = vmul.f32 %v1150, %v1160
        %v1165 = vmul.f32 %v1145, %v1163
        %v1166 = vmul.f32 %v1144, %v1164
        %v1167 = vadd.f32 %v1137, %v1165
        %v1168 = vadd.f32 %v1138, %v1166
        %1169 = vrot.lane.b32.xlu0 %v1074, 32
        %v1170 = vpop.permute.xlu0 %1169
        %1171 = vrot.lane.b32.xlu0 %v1075, 32
        %v1172 = vpop.permute.xlu0 %1171
        %vm1173 = vcmp.lt.s32.totalorder %v447, 32
        %v1174 = vsel %vm1173, %v1170, %v1172
        %v1175 = vsel %vm1173, %v1172, %v1170
        %s1176 = scalar_lea.vmem [#allocation8], 3
        %v1177 = vld [vmem:[%s1176] ss:$8 sm:$0x3]
        %1178 = vset.pattern.permute.xlu0 3
        %1179 = vperm.xlu0 %1178, %v1085
        %v1180 = vpop.permute.xlu0 %1179
        %v1183 = vlaneseq
        %v1184 = vshrl.u32 %v1183, 7
        %v1185 = vsub.s32 0, %v1184
        %v1186 = vrot.slane %v1177, %v1185
        %v1187 = vlaneseq
        %v1188 = vshrl.u32 %v1187, 7
        %v1189 = vsub.s32 1, %v1188
        %v1190 = vrot.slane %v1177, %v1189
        %v1193 = vmul.f32 %v1180, %v1186
        %v1194 = vmul.f32 %v1180, %v1190
        %v1195 = vmul.f32 %v1175, %v1193
        %v1196 = vmul.f32 %v1174, %v1194
        %v1197 = vadd.f32 %v1167, %v1195
        %v1198 = vadd.f32 %v1168, %v1196
        %1199 = vrot.lane.b32.xlu0 %v1074, 16
        %v1200 = vpop.permute.xlu0 %1199
        %1201 = vrot.lane.b32.xlu0 %v1075, 16
        %v1202 = vpop.permute.xlu0 %1201
        %v1203 = vsel %vm479, %v1200, %v1202
        %v1204 = vsel %vm479, %v1202, %v1200
        %s1205 = scalar_lea.vmem [#allocation8], 4
        %v1206 = vld [vmem:[%s1205] ss:$8 sm:$0x3]
        %1207 = vset.pattern.permute.xlu0 4
        %1208 = vperm.xlu0 %1207, %v1085
        %v1209 = vpop.permute.xlu0 %1208
        %v1212 = vlaneseq
        %v1213 = vshrl.u32 %v1212, 7
        %v1214 = vsub.s32 0, %v1213
        %v1215 = vrot.slane %v1206, %v1214
        %v1216 = vlaneseq
        %v1217 = vshrl.u32 %v1216, 7
        %v1218 = vsub.s32 1, %v1217
        %v1219 = vrot.slane %v1206, %v1218
        %v1222 = vmul.f32 %v1209, %v1215
        %v1223 = vmul.f32 %v1209, %v1219
        %v1224 = vmul.f32 %v1204, %v1222
        %v1225 = vmul.f32 %v1203, %v1223
        %v1226 = vadd.f32 %v1197, %v1224
        %v1227 = vadd.f32 %v1198, %v1225
        %s1228 = scalar_lea.vmem [#allocation8], 5
        %v1229 = vld [vmem:[%s1228] ss:$8 sm:$0x3]
        %1230 = vset.pattern.permute.xlu0 5
        %1231 = vperm.xlu0 %1230, %v1085
        %v1232 = vpop.permute.xlu0 %1231
        %v1235 = vlaneseq
        %v1236 = vshrl.u32 %v1235, 7
        %v1237 = vsub.s32 0, %v1236
        %v1238 = vrot.slane %v1229, %v1237
        %v1239 = vlaneseq
        %v1240 = vshrl.u32 %v1239, 7
        %v1241 = vsub.s32 1, %v1240
        %v1242 = vrot.slane %v1229, %v1241
        %v1245 = vmul.f32 %v1232, %v1238
        %v1246 = vmul.f32 %v1232, %v1242
        %v1249 = vrot.slane %v1245, 4
        %v1250 = vrot.slane %v1246, 4
        %v1253 = vmul.f32 %v1070, %v1249
        %v1254 = vmul.f32 %v1071, %v1250
        %v1257 = vrot.slane %v1253, 4
        %v1258 = vrot.slane %v1254, 4
        %v1261 = vadd.f32 %v1226, %v1257
        %v1262 = vadd.f32 %v1227, %v1258
        %1263 = vrot.lane.b32.xlu0 %v1074, 112
        %v1264 = vpop.permute.xlu0 %1263
        %1265 = vrot.lane.b32.xlu0 %v1075, 112
        %v1266 = vpop.permute.xlu0 %1265
        %v1267 = vsel %vm664, %v1264, %v1266
        %v1268 = vsel %vm664, %v1266, %v1264
        %s1269 = scalar_lea.vmem [#allocation8], 6
        %v1270 = vld [vmem:[%s1269] ss:$8 sm:$0x3]
        %1271 = vset.pattern.permute.xlu0 6
        %1272 = vperm.xlu0 %1271, %v1085
        %v1273 = vpop.permute.xlu0 %1272
        %v1276 = vlaneseq
        %v1277 = vshrl.u32 %v1276, 7
        %v1278 = vsub.s32 0, %v1277
        %v1279 = vrot.slane %v1270, %v1278
        %v1280 = vlaneseq
        %v1281 = vshrl.u32 %v1280, 7
        %v1282 = vsub.s32 1, %v1281
        %v1283 = vrot.slane %v1270, %v1282
        %v1286 = vmul.f32 %v1273, %v1279
        %v1287 = vmul.f32 %v1273, %v1283
        %v1288 = vmul.f32 %v1267, %v1286
        %v1289 = vmul.f32 %v1268, %v1287
        %v1290 = vadd.f32 %v1261, %v1288
        %v1291 = vadd.f32 %v1262, %v1289
        %1292 = vrot.lane.b32.xlu0 %v1074, 96
        %v1293 = vpop.permute.xlu0 %1292
        %1294 = vrot.lane.b32.xlu0 %v1075, 96
        %v1295 = vpop.permute.xlu0 %1294
        %vm1296 = vcmp.lt.s32.totalorder %v447, 96
        %v1297 = vsel %vm1296, %v1293, %v1295
        %v1298 = vsel %vm1296, %v1295, %v1293
        %s1299 = scalar_lea.vmem [#allocation8], 7
        %v1300 = vld [vmem:[%s1299] ss:$8 sm:$0x3]
        %1301 = vset.pattern.permute.xlu0 7
        %1302 = vperm.xlu0 %1301, %v1085
        %v1303 = vpop.permute.xlu0 %1302
        %v1306 = vlaneseq
        %v1307 = vshrl.u32 %v1306, 7
        %v1308 = vsub.s32 0, %v1307
        %v1309 = vrot.slane %v1300, %v1308
        %v1310 = vlaneseq
        %v1311 = vshrl.u32 %v1310, 7
        %v1312 = vsub.s32 1, %v1311
        %v1313 = vrot.slane %v1300, %v1312
        %v1316 = vmul.f32 %v1303, %v1309
        %v1317 = vmul.f32 %v1303, %v1313
        %v1318 = vmul.f32 %v1297, %v1316
        %v1319 = vmul.f32 %v1298, %v1317
        %v1320 = vadd.f32 %v1290, %v1318
        %v1321 = vadd.f32 %v1291, %v1319
        %s1322 = scalar_lea.vmem [#allocation8], 16
        %v1323 = vld [vmem:[%s1322] ss:$8 sm:$0x3]
        %1324 = vset.pattern.permute.xlu0 8
        %1325 = vperm.xlu0 %1324, %v1085
        %v1326 = vpop.permute.xlu0 %1325
        %v1329 = vlaneseq
        %v1330 = vshrl.u32 %v1329, 7
        %v1331 = vsub.s32 0, %v1330
        %v1332 = vrot.slane %v1323, %v1331
        %v1333 = vlaneseq
        %v1334 = vshrl.u32 %v1333, 7
        %v1335 = vsub.s32 1, %v1334
        %v1336 = vrot.slane %v1323, %v1335
        %v1339 = vmul.f32 %v1326, %v1332
        %v1340 = vmul.f32 %v1326, %v1336
        %v1341 = vmul.f32 %v1083, %v1339
        %v1342 = vmul.f32 %v1084, %v1340
        %v1343 = vadd.f32 %v1320, %v1341
        %v1344 = vadd.f32 %v1321, %v1342
        %s1345 = scalar_lea.vmem [#allocation8], 17
        %v1346 = vld [vmem:[%s1345] ss:$8 sm:$0x3]
        %1347 = vset.pattern.permute.xlu0 9
        %1348 = vperm.xlu0 %1347, %v1085
        %v1349 = vpop.permute.xlu0 %1348
        %v1352 = vlaneseq
        %v1353 = vshrl.u32 %v1352, 7
        %v1354 = vsub.s32 0, %v1353
        %v1355 = vrot.slane %v1346, %v1354
        %v1356 = vlaneseq
        %v1357 = vshrl.u32 %v1356, 7
        %v1358 = vsub.s32 1, %v1357
        %v1359 = vrot.slane %v1346, %v1358
        %v1362 = vmul.f32 %v1349, %v1355
        %v1363 = vmul.f32 %v1349, %v1359
        %v1364 = vmul.f32 %v1114, %v1362
        %v1365 = vmul.f32 %v1115, %v1363
        %v1366 = vadd.f32 %v1343, %v1364
        %v1367 = vadd.f32 %v1344, %v1365
        %s1368 = scalar_lea.vmem [#allocation8], 18
        %v1369 = vld [vmem:[%s1368] ss:$8 sm:$0x3]
        %1370 = vset.pattern.permute.xlu0 10
        %1371 = vperm.xlu0 %1370, %v1085
        %v1372 = vpop.permute.xlu0 %1371
        %v1375 = vlaneseq
        %v1376 = vshrl.u32 %v1375, 7
        %v1377 = vsub.s32 0, %v1376
        %v1378 = vrot.slane %v1369, %v1377
        %v1379 = vlaneseq
        %v1380 = vshrl.u32 %v1379, 7
        %v1381 = vsub.s32 1, %v1380
        %v1382 = vrot.slane %v1369, %v1381
        %v1385 = vmul.f32 %v1372, %v1378
        %v1386 = vmul.f32 %v1372, %v1382
        %v1387 = vmul.f32 %v1144, %v1385
        %v1388 = vmul.f32 %v1145, %v1386
        %v1389 = vadd.f32 %v1366, %v1387
        %v1390 = vadd.f32 %v1367, %v1388
        %v1391 = vld [vmem:[%s6] sm:$0xf]
        %1393 = vset.pattern.permute.xlu0 0
        %1394 = vperm.xlu0 %1393, %v1391
        %v1395 = vpop.permute.xlu0 %1394
        %v1397 = vadd.f32 %v1389, %v1395
        %v1398 = vadd.f32 %v1390, %v1395
        %v1401 = vrot.slane %v1397, 4
        %v1402 = vrot.slane %v1398, 4
        %1405 = vst [vmem:[%s421 + $0x30] sm:$0xf0] %v1401
        %1406 = vst [vmem:[%s421 + $0x38] sm:$0xf0] %v1402
        %s1407 = sand.u32 %s252, 1
        %s1408 = scalar_lea.sflag [#allocation4], %s1407
        %s1409 = sand.u32 %s252, 1
        %s1410 = smul.addr %s1409, 64
        %s1411 = scalar_lea.vmem [#allocation10], %s1410
        // Predicated region
        $region77: #{tpu_custom_call.1} parent=59 // pred_check
          %p1412 = pneg %p262
        $region78: #{tpu_custom_call.1} parent=59 // pred_check_branch
          %1414 = sbr.rel (%p1412) target = $region80
        $region79: #{tpu_custom_call.1} parent=59 // pred_region
          %s1416 = ssub.s32 1024, 1024
          %1417 = vsyncadd %s1408, %s1416
          %s1418 = smul.addr %s29, 8
          %s1419 = smul.addr %s1418, 128
          %s1420 = scalar_lea.hbm %s10, %s1419
          %s1421 = sshll.u32 %s1411, 4
          %s1422 = int_to_ptr.vmem [resolvable:$true] %s1421
          %1427 = dma.vmem_to_hbm [thread:$0]  %s1422, 1024, %s1420, %s1408, 256, 256, 16
        $region80: #{tpu_custom_call.1} parent=59 // pred_fallthru
          _
      $region60: #{tpu_custom_call.1} parent=5 // pred_fallthru
        _
      %p1428 = scmp.le.s32.totalorder 2, %s24
      // Predicated region
      $region81: #{tpu_custom_call.1} parent=5 // pred_check
        %p1429 = pneg %p1428
      $region82: #{tpu_custom_call.1} parent=5 // pred_check_branch
        %1431 = sbr.rel (%p1429) target = $region84
      $region83: #{tpu_custom_call.1} parent=5 // pred_region
        %s1432 = ssub.s32 %s24, 2
        // Predicated region
        $region85: #{tpu_custom_call.1} parent=83 // pred_check
          %p1433 = pneg %p268
        $region86: #{tpu_custom_call.1} parent=83 // pred_check_branch
          %1435 = sbr.rel (%p1433) target = $region88
        $region87: #{tpu_custom_call.1} parent=83 // pred_region
          %s1436 = sand.u32 %s253, 1
          %s1437 = scalar_lea.sflag [#allocation4], %s1436
          %s1438 = sand.u32 %s253, 1
          %s1439 = smul.addr %s1438, 64
          %s1440 = scalar_lea.vmem [#allocation10], %s1439
          %1441 = dma.done %s1437, 1024
        $region88: #{tpu_custom_call.1} parent=83 // pred_fallthru
          _
      $region84: #{tpu_custom_call.1} parent=5 // pred_fallthru
        _
    $region6: #{tpu_custom_call.1} parent=1 // loop_footer
      %s28 = sadd.s32 1, %s24
    $region7: #{tpu_custom_call.1} parent=1 // loop_footer_branch
      %23 = sbr.rel target = $region3
    $region8: #{tpu_custom_call.1} parent=1 // loop_exit
      _
    %1442 = vsyncpa [#allocation3], 1
    %s1443 = scalar_lea.sflag [#allocation3], 1
    %1444 = vsyncpa %s1443, 1
    %1445 = vsyncpa [#allocation6], 1
    %1446 = vsyncpa [#allocation9], 1
    %1447 = vsyncpa [#allocation4], 1
    %s1448 = scalar_lea.sflag [#allocation4], 1
    %1449 = vsyncpa %s1448, 1

</llo_original>
